<compile_context>
chip_gen: v6e
topology: v6e:2x2x1
jax: 0.10.0
libtpu: 0.0.40
codegen_flags: <defaults>
</compile_context>

<pallas_src>
import numpy as np
import jax
import jax.numpy as jnp
from jax import lax
from jax.experimental import pallas as pl
from jax.experimental.pallas import tpu as pltpu


# ----------------------------------------------------------------------------
# Single fused kernel (one batch element per grid step)
# ----------------------------------------------------------------------------
def fused_output_kernel(pt_ref, w3t_ref, b3_ref, w1t_ref, b1_ref,
                        awt_ref, ahb_ref, out_ref, t1_ref):
    """
    pt_ref : (1, 9*Cin, H*W)  im2col patches, column index = h*W + w
    w3t_ref: (Cmid, 9*Cin)    BN-folded 3x3 weights (transposed, tap-major K)
    b3_ref : (Cmid, 1)        BN-folded bias (column vector)
    w1t_ref: (nc, Cmid)       1x1 conv weights (transposed)
    b1_ref : (nc, 1)          1x1 conv bias (column vector)
    awt_ref: (W, Wo)          width interpolation matrix (transposed)
    ahb_ref: (nc*Ho, H*nc)    channel-interleaved block height matrix:
                              ahb[c*Ho + ho, h*nc + c] = A_h[ho, h]
    out_ref: (1, nc*Ho, Wo)   final output, row index = c*Ho + ho (NCHW order)
    t1_ref : (H*nc, Wo)       VMEM scratch, row index = h*nc + c
    """
    nc = w1t_ref.shape[0]
    W, Wo = awt_ref.shape
    H = t1_ref.shape[0] // nc

    # --- conv3x3 (single im2col matmul, K = 9*Cin) + folded BN + ReLU -------
    acc = jnp.dot(w3t_ref[...], pt_ref[0],
                  preferred_element_type=jnp.float32)            # [Cmid, H*W]
    acc = jnp.maximum(acc + b3_ref[...], 0.0)

    # --- 1x1 conv (+bias) ----------------------------------------------------
    y = jnp.dot(w1t_ref[...], acc,
                preferred_element_type=jnp.float32) + b1_ref[...]  # [nc, H*W]

    # --- width upsample: per input row h, [nc, W] @ [W, Wo] (tiny, unrolled) -
    # Rows are written as (h, c) blocks into VMEM scratch so the height step
    # below is a single matmul with no relayout/reshape in between.
    for h in range(H):
        yh = y[:, h * W:(h + 1) * W]                               # [nc, W]
        t1_ref[h * nc:(h + 1) * nc, :] = jnp.dot(
            yh, awt_ref[...], preferred_element_type=jnp.float32)  # [nc, Wo]

    # --- height upsample for all channels at once: one big MXU matmul -------
    # [nc*Ho, H*nc] @ [H*nc, Wo] -> rows already in final (c, ho) order.
    out = jnp.dot(ahb_ref[...], t1_ref[...],
                  preferred_element_type=jnp.float32)              # [nc*Ho, Wo]
    out_ref[0] = out.astype(out_ref.dtype)                         # lane-dense store


# ----------------------------------------------------------------------------
# Bilinear interpolation matrix (PyTorch align_corners=False semantics)
# ----------------------------------------------------------------------------
def bilinear_matrix(in_size, scale):
    out_size = in_size * scale
    src = (np.arange(out_size, dtype=np.float64) + 0.5) / scale - 0.5
    src = np.clip(src, 0.0, None)
    x0 = np.minimum(np.floor(src).astype(np.int64), in_size - 1)
    x1 = np.minimum(x0 + 1, in_size - 1)
    lam = src - x0
    A = np.zeros((out_size, in_size), dtype=np.float32)
    rows = np.arange(out_size)
    A[rows, x0] += (1.0 - lam).astype(np.float32)
    A[rows, x1] += lam.astype(np.float32)
    return A


def build_interp_mats(H, W, nc, up_factor):
    Ho, Wo = H * up_factor, W * up_factor
    A_h = bilinear_matrix(H, up_factor)                 # (Ho, H)
    A_w = bilinear_matrix(W, up_factor)                 # (Wo, W)
    # Channel-interleaved block-diagonal height matrix: one matmul produces the
    # final NCHW row order directly. ahb[c*Ho + ho, h*nc + c] = A_h[ho, h].
    ahb = np.zeros((nc * Ho, H * nc), dtype=np.float32)
    for c in range(nc):
        ahb[c * Ho:(c + 1) * Ho, c::nc] = A_h
    return (jnp.asarray(A_h), jnp.asarray(A_w),
            jnp.asarray(np.ascontiguousarray(A_w.T)), jnp.asarray(ahb))


# ----------------------------------------------------------------------------
# Wrapper-side im2col (tiny; keeps all per-tap relayouts out of the kernel)
# ----------------------------------------------------------------------------
def im2col_nchw(x_nchw):
    N, Cin, H, W = x_nchw.shape
    x = jnp.transpose(x_nchw, (0, 2, 3, 1))                         # NHWC
    xp = jnp.pad(x, ((0, 0), (1, 1), (1, 1), (0, 0)))               # zero pad
    taps = [xp[:, dy:dy + H, dx:dx + W, :]
            for dy in range(3) for dx in range(3)]                  # 9 x (N,H,W,Cin)
    p = jnp.stack(taps, axis=1)                                     # (N,9,H,W,Cin)
    p = jnp.transpose(p, (0, 1, 4, 2, 3))                           # (N,9,Cin,H,W)
    return p.reshape(N, 9 * Cin, H * W)                             # (N,9*Cin,H*W)


# ----------------------------------------------------------------------------
# Parameter construction (deterministic, synthetic) + BN folding
# ----------------------------------------------------------------------------
def init_params(key, in_chan, mid_chan, n_classes):
    ks = jax.random.split(key, 8)
    w3 = jax.random.normal(ks[0], (3, 3, in_chan, mid_chan), jnp.float32) * 0.1
    gamma = 1.0 + 0.1 * jax.random.normal(ks[1], (mid_chan,), jnp.float32)
    beta = 0.1 * jax.random.normal(ks[2], (mid_chan,), jnp.float32)
    run_mean = 0.1 * jax.random.normal(ks[3], (mid_chan,), jnp.float32)
    run_var = jnp.abs(jax.random.normal(ks[4], (mid_chan,), jnp.float32)) + 0.5
    w1 = jax.random.normal(ks[5], (mid_chan, n_classes), jnp.float32) * 0.1
    b1 = 0.1 * jax.random.normal(ks[6], (n_classes,), jnp.float32)

    eps = 1e-5
    s = gamma / jnp.sqrt(run_var + eps)
    w3f = w3 * s[None, None, None, :]            # folded 3x3 weight (3,3,Cin,Cmid)
    b3f = beta - run_mean * s                    # (Cmid,)

    base = dict(w3f=w3f, b3f=b3f, w1=w1, b1=b1)  # for the pure-JAX reference
    kernel_params = dict(
        w3t=w3f.reshape(9 * in_chan, mid_chan).T,    # (Cmid, 9*Cin)
        b3=b3f[:, None],                             # (Cmid, 1)
        w1t=w1.T,                                    # (nc, Cmid)
        b1=b1[:, None],                              # (nc, 1)
    )
    return base, kernel_params


# ----------------------------------------------------------------------------
# Forward wrapper: single fused pallas_call
# ----------------------------------------------------------------------------
def output_forward(x_nchw, kp, up_factor=32):
    N, Cin, H, W = x_nchw.shape
    Cmid = kp["w3t"].shape[0]
    nc = kp["w1t"].shape[0]
    Ho, Wo = H * up_factor, W * up_factor

    patches = im2col_nchw(x_nchw)                                   # (N, 9*Cin, H*W)

    out_flat = pl.pallas_call(
        fused_output_kernel,
        out_shape=jax.ShapeDtypeStruct((N, nc * Ho, Wo), jnp.float32),
        grid_spec=pltpu.PrefetchScalarGridSpec(
            num_scalar_prefetch=0,
            grid=(N,),
            in_specs=[
                pl.BlockSpec((1, 9 * Cin, H * W), lambda n: (n, 0, 0)),
                pl.BlockSpec((Cmid, 9 * Cin), lambda n: (0, 0)),
                pl.BlockSpec((Cmid, 1), lambda n: (0, 0)),
                pl.BlockSpec((nc, Cmid), lambda n: (0, 0)),
                pl.BlockSpec((nc, 1), lambda n: (0, 0)),
                pl.BlockSpec((W, Wo), lambda n: (0, 0)),
                pl.BlockSpec((nc * Ho, H * nc), lambda n: (0, 0)),
            ],
            out_specs=pl.BlockSpec((1, nc * Ho, Wo), lambda n: (n, 0, 0)),
            scratch_shapes=[pltpu.VMEM((H * nc, Wo), jnp.float32)],
        ),
        compiler_params=pltpu.CompilerParams(
            dimension_semantics=("parallel",)),   # batch shards over 2 TCs on v7x
    )(patches, kp["w3t"], kp["b3"], kp["w1t"], kp["b1"], kp["awt"], kp["ahb"])

    # Metadata-only reshape to the PyTorch NCHW output layout.
    return out_flat.reshape(N, nc, Ho, Wo)


# ----------------------------------------------------------------------------
# Pure-JAX reference (same math, standard XLA ops) for a sanity check
# ----------------------------------------------------------------------------
def reference_forward(x_nchw, base, A_h, A_w):
    hp = lax.Precision.HIGHEST
    mid = lax.conv_general_dilated(
        x_nchw, base["w3f"], window_strides=(1, 1), padding=((1, 1), (1, 1)),
        dimension_numbers=("NCHW", "HWIO", "NCHW"), precision=hp)
    mid = jnp.maximum(mid + base["b3f"][None, :, None, None], 0.0)
    y = jnp.einsum("nmhw,mc->nchw", mid, base["w1"], precision=hp)
    y = y + base["b1"][None, :, None, None]
    up = jnp.einsum("oh,nchw->ncow", A_h, y, precision=hp)
    return jnp.einsum("pw,ncow->ncop", A_w, up, precision=hp)


if __name__ == "__main__":
    # Output(in_chan=16, mid_chan=32, n_classes=4, up_factor=32) on (2,16,8,8).
    N, Cin, H, W = 2, 16, 8, 8
    Cmid, n_classes, up_factor = 32, 4, 32

    key = jax.random.PRNGKey(0)
    kx, kparam = jax.random.split(key)
    x = jax.random.normal(kx, (N, Cin, H, W), jnp.float32)

    base, kparams = init_params(kparam, Cin, Cmid, n_classes)
    A_h, A_w, A_wT, ahb = build_interp_mats(H, W, n_classes, up_factor)
    kparams = dict(kparams, awt=A_wT, ahb=ahb)

    fwd = jax.jit(lambda xx: output_forward(xx, kparams, up_factor=up_factor))
    y = jax.block_until_ready(fwd(x))

    assert y.shape == (N, n_classes, H * up_factor, W * up_factor), y.shape
    assert bool(jnp.all(jnp.isfinite(y)))

    y_ref = reference_forward(x, base, A_h, A_w)
    err = float(jnp.max(jnp.abs(y - y_ref)))
    assert err < 5e-2, f"max abs err {err}"

    print("KERNEL_OK")
</pallas_src>

<mosaic_0001>
module attributes {stable_mosaic.version = 11 : i64} {
  func.func @fused_output_kernel(%arg0: i32, %arg1: memref<1x144x64xf32, #tpu.memory_space<vmem>>, %arg2: memref<32x144xf32, #tpu.memory_space<vmem>>, %arg3: memref<32x1xf32, #tpu.memory_space<vmem>>, %arg4: memref<4x32xf32, #tpu.memory_space<vmem>>, %arg5: memref<4x1xf32, #tpu.memory_space<vmem>>, %arg6: memref<8x256xf32, #tpu.memory_space<vmem>>, %arg7: memref<1024x32xf32, #tpu.memory_space<vmem>>, %arg8: memref<1x1024x256xf32, #tpu.memory_space<vmem>>, %arg9: memref<32x256xf32, #tpu.memory_space<vmem>>) attributes {dimension_semantics = [#tpu.dimension_semantics<parallel>], iteration_bounds = array<i64: 2>, scalar_prefetch = 0 : i64, scratch_operands = 1 : i64, tpu.core_type = #tpu.core_type<tc>, window_params = [{transform_indices = @transform_0, window_bounds = array<i64: 1, 144, 64>}, {pipeline_mode = #tpu.pipeline_mode<synchronous>, transform_indices = @transform_1, window_bounds = array<i64: 32, 144>}, {pipeline_mode = #tpu.pipeline_mode<synchronous>, transform_indices = @transform_2, window_bounds = array<i64: 32, 1>}, {pipeline_mode = #tpu.pipeline_mode<synchronous>, transform_indices = @transform_3, window_bounds = array<i64: 4, 32>}, {pipeline_mode = #tpu.pipeline_mode<synchronous>, transform_indices = @transform_4, window_bounds = array<i64: 4, 1>}, {pipeline_mode = #tpu.pipeline_mode<synchronous>, transform_indices = @transform_5, window_bounds = array<i64: 8, 256>}, {pipeline_mode = #tpu.pipeline_mode<synchronous>, transform_indices = @transform_6, window_bounds = array<i64: 1024, 32>}, {transform_indices = @transform_7, window_bounds = array<i64: 1, 1024, 256>}]} {
    %c0 = arith.constant 0 : index
    %c0_0 = arith.constant 0 : index
    %0 = vector.load %arg2[%c0, %c0_0] : memref<32x144xf32, #tpu.memory_space<vmem>>, vector<32x144xf32>
    %c0_1 = arith.constant 0 : index
    %c0_2 = arith.constant 0 : index
    %c0_3 = arith.constant 0 : index
    %1 = vector.load %arg1[%c0_1, %c0_2, %c0_3] : memref<1x144x64xf32, #tpu.memory_space<vmem>>, vector<1x144x64xf32>
    %2 = vector.shape_cast %1 : vector<1x144x64xf32> to vector<144x64xf32>
    %cst = arith.constant dense<0.000000e+00> : vector<32x64xf32>
    %3 = tpu.matmul %0, %2, %cst {dimension_numbers = #tpu.dot_dimension_numbers<[1], [0], [0], [1], [0, 0, 1, 1], [], []>} : vector<32x144xf32>, vector<144x64xf32>, vector<32x64xf32> -> vector<32x64xf32>
    %c0_4 = arith.constant 0 : index
    %c0_5 = arith.constant 0 : index
    %4 = vector.load %arg3[%c0_4, %c0_5] : memref<32x1xf32, #tpu.memory_space<vmem>>, vector<32x1xf32>
    %5 = vector.broadcast %4 : vector<32x1xf32> to vector<32x64xf32>
    %6 = arith.addf %3, %5 : vector<32x64xf32>
    %cst_6 = arith.constant 0.000000e+00 : f32
    %7 = vector.broadcast %cst_6 : f32 to vector<32x64xf32>
    %8 = arith.maximumf %6, %7 : vector<32x64xf32>
    %c0_7 = arith.constant 0 : index
    %c0_8 = arith.constant 0 : index
    %9 = vector.load %arg4[%c0_7, %c0_8] : memref<4x32xf32, #tpu.memory_space<vmem>>, vector<4x32xf32>
    %cst_9 = arith.constant dense<0.000000e+00> : vector<4x64xf32>
    %10 = tpu.matmul %9, %8, %cst_9 {dimension_numbers = #tpu.dot_dimension_numbers<[1], [0], [0], [1], [0, 0, 1, 1], [], []>} : vector<4x32xf32>, vector<32x64xf32>, vector<4x64xf32> -> vector<4x64xf32>
    %c0_10 = arith.constant 0 : index
    %c0_11 = arith.constant 0 : index
    %11 = vector.load %arg5[%c0_10, %c0_11] : memref<4x1xf32, #tpu.memory_space<vmem>>, vector<4x1xf32>
    %12 = vector.broadcast %11 : vector<4x1xf32> to vector<4x64xf32>
    %13 = arith.addf %10, %12 : vector<4x64xf32>
    %14 = vector.extract_strided_slice %13 {offsets = [0, 0], sizes = [4, 8], strides = [1, 1]} : vector<4x64xf32> to vector<4x8xf32>
    %c0_12 = arith.constant 0 : index
    %c0_13 = arith.constant 0 : index
    %15 = vector.load %arg6[%c0_12, %c0_13] : memref<8x256xf32, #tpu.memory_space<vmem>>, vector<8x256xf32>
    %cst_14 = arith.constant dense<0.000000e+00> : vector<4x256xf32>
    %16 = tpu.matmul %14, %15, %cst_14 {dimension_numbers = #tpu.dot_dimension_numbers<[1], [0], [0], [1], [0, 0, 1, 1], [], []>} : vector<4x8xf32>, vector<8x256xf32>, vector<4x256xf32> -> vector<4x256xf32>
    %c0_15 = arith.constant 0 : index
    %c0_16 = arith.constant 0 : index
    %17 = vector.load %arg9[%c0_15, %c0_16] : memref<32x256xf32, #tpu.memory_space<vmem>>, vector<4x256xf32>
    tpu.vector_store %arg9[%c0_15, %c0_16], %16 {strides = array<i32>} : memref<32x256xf32, #tpu.memory_space<vmem>>, vector<4x256xf32>,
    %18 = vector.extract_strided_slice %13 {offsets = [0, 8], sizes = [4, 8], strides = [1, 1]} : vector<4x64xf32> to vector<4x8xf32>
    %c0_17 = arith.constant 0 : index
    %c0_18 = arith.constant 0 : index
    %19 = vector.load %arg6[%c0_17, %c0_18] : memref<8x256xf32, #tpu.memory_space<vmem>>, vector<8x256xf32>
    %cst_19 = arith.constant dense<0.000000e+00> : vector<4x256xf32>
    %20 = tpu.matmul %18, %19, %cst_19 {dimension_numbers = #tpu.dot_dimension_numbers<[1], [0], [0], [1], [0, 0, 1, 1], [], []>} : vector<4x8xf32>, vector<8x256xf32>, vector<4x256xf32> -> vector<4x256xf32>
    %c4 = arith.constant 4 : index
    %c0_20 = arith.constant 0 : index
    %21 = vector.load %arg9[%c4, %c0_20] : memref<32x256xf32, #tpu.memory_space<vmem>>, vector<4x256xf32>
    tpu.vector_store %arg9[%c4, %c0_20], %20 {strides = array<i32>} : memref<32x256xf32, #tpu.memory_space<vmem>>, vector<4x256xf32>,
    %22 = vector.extract_strided_slice %13 {offsets = [0, 16], sizes = [4, 8], strides = [1, 1]} : vector<4x64xf32> to vector<4x8xf32>
    %c0_21 = arith.constant 0 : index
    %c0_22 = arith.constant 0 : index
    %23 = vector.load %arg6[%c0_21, %c0_22] : memref<8x256xf32, #tpu.memory_space<vmem>>, vector<8x256xf32>
    %cst_23 = arith.constant dense<0.000000e+00> : vector<4x256xf32>
    %24 = tpu.matmul %22, %23, %cst_23 {dimension_numbers = #tpu.dot_dimension_numbers<[1], [0], [0], [1], [0, 0, 1, 1], [], []>} : vector<4x8xf32>, vector<8x256xf32>, vector<4x256xf32> -> vector<4x256xf32>
    %c8 = arith.constant 8 : index
    %c0_24 = arith.constant 0 : index
    %25 = vector.load %arg9[%c8, %c0_24] : memref<32x256xf32, #tpu.memory_space<vmem>>, vector<4x256xf32>
    tpu.vector_store %arg9[%c8, %c0_24], %24 {strides = array<i32>} : memref<32x256xf32, #tpu.memory_space<vmem>>, vector<4x256xf32>,
    %26 = vector.extract_strided_slice %13 {offsets = [0, 24], sizes = [4, 8], strides = [1, 1]} : vector<4x64xf32> to vector<4x8xf32>
    %c0_25 = arith.constant 0 : index
    %c0_26 = arith.constant 0 : index
    %27 = vector.load %arg6[%c0_25, %c0_26] : memref<8x256xf32, #tpu.memory_space<vmem>>, vector<8x256xf32>
    %cst_27 = arith.constant dense<0.000000e+00> : vector<4x256xf32>
    %28 = tpu.matmul %26, %27, %cst_27 {dimension_numbers = #tpu.dot_dimension_numbers<[1], [0], [0], [1], [0, 0, 1, 1], [], []>} : vector<4x8xf32>, vector<8x256xf32>, vector<4x256xf32> -> vector<4x256xf32>
    %c12 = arith.constant 12 : index
    %c0_28 = arith.constant 0 : index
    %29 = vector.load %arg9[%c12, %c0_28] : memref<32x256xf32, #tpu.memory_space<vmem>>, vector<4x256xf32>
    tpu.vector_store %arg9[%c12, %c0_28], %28 {strides = array<i32>} : memref<32x256xf32, #tpu.memory_space<vmem>>, vector<4x256xf32>,
    %30 = vector.extract_strided_slice %13 {offsets = [0, 32], sizes = [4, 8], strides = [1, 1]} : vector<4x64xf32> to vector<4x8xf32>
    %c0_29 = arith.constant 0 : index
    %c0_30 = arith.constant 0 : index
    %31 = vector.load %arg6[%c0_29, %c0_30] : memref<8x256xf32, #tpu.memory_space<vmem>>, vector<8x256xf32>
    %cst_31 = arith.constant dense<0.000000e+00> : vector<4x256xf32>
    %32 = tpu.matmul %30, %31, %cst_31 {dimension_numbers = #tpu.dot_dimension_numbers<[1], [0], [0], [1], [0, 0, 1, 1], [], []>} : vector<4x8xf32>, vector<8x256xf32>, vector<4x256xf32> -> vector<4x256xf32>
    %c16 = arith.constant 16 : index
    %c0_32 = arith.constant 0 : index
    %33 = vector.load %arg9[%c16, %c0_32] : memref<32x256xf32, #tpu.memory_space<vmem>>, vector<4x256xf32>
    tpu.vector_store %arg9[%c16, %c0_32], %32 {strides = array<i32>} : memref<32x256xf32, #tpu.memory_space<vmem>>, vector<4x256xf32>,
    %34 = vector.extract_strided_slice %13 {offsets = [0, 40], sizes = [4, 8], strides = [1, 1]} : vector<4x64xf32> to vector<4x8xf32>
    %c0_33 = arith.constant 0 : index
    %c0_34 = arith.constant 0 : index
    %35 = vector.load %arg6[%c0_33, %c0_34] : memref<8x256xf32, #tpu.memory_space<vmem>>, vector<8x256xf32>
    %cst_35 = arith.constant dense<0.000000e+00> : vector<4x256xf32>
    %36 = tpu.matmul %34, %35, %cst_35 {dimension_numbers = #tpu.dot_dimension_numbers<[1], [0], [0], [1], [0, 0, 1, 1], [], []>} : vector<4x8xf32>, vector<8x256xf32>, vector<4x256xf32> -> vector<4x256xf32>
    %c20 = arith.constant 20 : index
    %c0_36 = arith.constant 0 : index
    %37 = vector.load %arg9[%c20, %c0_36] : memref<32x256xf32, #tpu.memory_space<vmem>>, vector<4x256xf32>
    tpu.vector_store %arg9[%c20, %c0_36], %36 {strides = array<i32>} : memref<32x256xf32, #tpu.memory_space<vmem>>, vector<4x256xf32>,
    %38 = vector.extract_strided_slice %13 {offsets = [0, 48], sizes = [4, 8], strides = [1, 1]} : vector<4x64xf32> to vector<4x8xf32>
    %c0_37 = arith.constant 0 : index
    %c0_38 = arith.constant 0 : index
    %39 = vector.load %arg6[%c0_37, %c0_38] : memref<8x256xf32, #tpu.memory_space<vmem>>, vector<8x256xf32>
    %cst_39 = arith.constant dense<0.000000e+00> : vector<4x256xf32>
    %40 = tpu.matmul %38, %39, %cst_39 {dimension_numbers = #tpu.dot_dimension_numbers<[1], [0], [0], [1], [0, 0, 1, 1], [], []>} : vector<4x8xf32>, vector<8x256xf32>, vector<4x256xf32> -> vector<4x256xf32>
    %c24 = arith.constant 24 : index
    %c0_40 = arith.constant 0 : index
    %41 = vector.load %arg9[%c24, %c0_40] : memref<32x256xf32, #tpu.memory_space<vmem>>, vector<4x256xf32>
    tpu.vector_store %arg9[%c24, %c0_40], %40 {strides = array<i32>} : memref<32x256xf32, #tpu.memory_space<vmem>>, vector<4x256xf32>,
    %42 = vector.extract_strided_slice %13 {offsets = [0, 56], sizes = [4, 8], strides = [1, 1]} : vector<4x64xf32> to vector<4x8xf32>
    %c0_41 = arith.constant 0 : index
    %c0_42 = arith.constant 0 : index
    %43 = vector.load %arg6[%c0_41, %c0_42] : memref<8x256xf32, #tpu.memory_space<vmem>>, vector<8x256xf32>
    %cst_43 = arith.constant dense<0.000000e+00> : vector<4x256xf32>
    %44 = tpu.matmul %42, %43, %cst_43 {dimension_numbers = #tpu.dot_dimension_numbers<[1], [0], [0], [1], [0, 0, 1, 1], [], []>} : vector<4x8xf32>, vector<8x256xf32>, vector<4x256xf32> -> vector<4x256xf32>
    %c28 = arith.constant 28 : index
    %c0_44 = arith.constant 0 : index
    %45 = vector.load %arg9[%c28, %c0_44] : memref<32x256xf32, #tpu.memory_space<vmem>>, vector<4x256xf32>
    tpu.vector_store %arg9[%c28, %c0_44], %44 {strides = array<i32>} : memref<32x256xf32, #tpu.memory_space<vmem>>, vector<4x256xf32>,
    %c0_45 = arith.constant 0 : index
    %c0_46 = arith.constant 0 : index
    %46 = vector.load %arg7[%c0_45, %c0_46] : memref<1024x32xf32, #tpu.memory_space<vmem>>, vector<1024x32xf32>
    %c0_47 = arith.constant 0 : index
    %c0_48 = arith.constant 0 : index
    %47 = vector.load %arg9[%c0_47, %c0_48] : memref<32x256xf32, #tpu.memory_space<vmem>>, vector<32x256xf32>
    %cst_49 = arith.constant dense<0.000000e+00> : vector<1024x256xf32>
    %48 = tpu.matmul %46, %47, %cst_49 {dimension_numbers = #tpu.dot_dimension_numbers<[1], [0], [0], [1], [0, 0, 1, 1], [], []>} : vector<1024x32xf32>, vector<32x256xf32>, vector<1024x256xf32> -> vector<1024x256xf32>
    %c0_50 = arith.constant 0 : index
    %c0_51 = arith.constant 0 : index
    %c0_52 = arith.constant 0 : index
    %49 = vector.load %arg8[%c0_50, %c0_51, %c0_52] : memref<1x1024x256xf32, #tpu.memory_space<vmem>>, vector<1x1024x256xf32>
    %50 = vector.shape_cast %49 : vector<1x1024x256xf32> to vector<1024x256xf32>
    %51 = vector.shape_cast %48 : vector<1024x256xf32> to vector<1x1024x256xf32>
    tpu.vector_store %arg8[%c0_50, %c0_51, %c0_52], %51 {strides = array<i32>} : memref<1x1024x256xf32, #tpu.memory_space<vmem>>, vector<1x1024x256xf32>,
    return
  }
  func.func @transform_0(%arg0: i32) -> (i32, i32, i32) {
    %c0_i32 = arith.constant 0 : i32
    %c0_i32_0 = arith.constant 0 : i32
    %c0_i32_1 = arith.constant 0 : i32
    return %arg0, %c0_i32, %c0_i32_0 : i32, i32, i32
  }
  func.func @transform_1(%arg0: i32) -> (i32, i32) {
    %c0_i32 = arith.constant 0 : i32
    %c0_i32_0 = arith.constant 0 : i32
    %c0_i32_1 = arith.constant 0 : i32
    return %c0_i32, %c0_i32_0 : i32, i32
  }
  func.func @transform_2(%arg0: i32) -> (i32, i32) {
    %c0_i32 = arith.constant 0 : i32
    %c0_i32_0 = arith.constant 0 : i32
    %c0_i32_1 = arith.constant 0 : i32
    return %c0_i32, %c0_i32_0 : i32, i32
  }
  func.func @transform_3(%arg0: i32) -> (i32, i32) {
    %c0_i32 = arith.constant 0 : i32
    %c0_i32_0 = arith.constant 0 : i32
    %c0_i32_1 = arith.constant 0 : i32
    return %c0_i32, %c0_i32_0 : i32, i32
  }
  func.func @transform_4(%arg0: i32) -> (i32, i32) {
    %c0_i32 = arith.constant 0 : i32
    %c0_i32_0 = arith.constant 0 : i32
    %c0_i32_1 = arith.constant 0 : i32
    return %c0_i32, %c0_i32_0 : i32, i32
  }
  func.func @transform_5(%arg0: i32) -> (i32, i32) {
    %c0_i32 = arith.constant 0 : i32
    %c0_i32_0 = arith.constant 0 : i32
    %c0_i32_1 = arith.constant 0 : i32
    return %c0_i32, %c0_i32_0 : i32, i32
  }
  func.func @transform_6(%arg0: i32) -> (i32, i32) {
    %c0_i32 = arith.constant 0 : i32
    %c0_i32_0 = arith.constant 0 : i32
    %c0_i32_1 = arith.constant 0 : i32
    return %c0_i32, %c0_i32_0 : i32, i32
  }
  func.func @transform_7(%arg0: i32) -> (i32, i32, i32) {
    %c0_i32 = arith.constant 0 : i32
    %c0_i32_0 = arith.constant 0 : i32
    %c0_i32_1 = arith.constant 0 : i32
    return %arg0, %c0_i32, %c0_i32_0 : i32, i32, i32
  }
}

</mosaic_0001>

<llo_original>
// kernel: _lambda_.1
$region0: #{_lambda_.1}
  #allocation0 [shape = 'u32[]', space=smem, size = 0x4, offset = 0x4, fixed_abs, tag = 'smem constant byte address 0x4 - core index']
  #allocation1 [shape = 'u32[144,128]{1,0:T(1,128)}', space=vmem, size = 0x12000, scoped, tag = 'internal scratch']
  #allocation2 [shape = 'f32[32,256]{1,0:T(8,128)}', space=vmem, size = 0x8000, scoped, tag = 'scratch operand']
  %s0 = inlined_call_operand.vmem [shape: f32[2,144,64], index: 0, kind: input, shape index: {}]
  %s1 = inlined_call_operand.vmem [shape: f32[32,144], index: 1, kind: input, shape index: {}]
  %s2 = inlined_call_operand.vmem [shape: f32[32,1], index: 2, kind: input, shape index: {}]
  %s3 = inlined_call_operand.vmem [shape: f32[4,32], index: 3, kind: input, shape index: {}]
  %s4 = inlined_call_operand.vmem [shape: f32[4,1], index: 4, kind: input, shape index: {}]
  %s5 = inlined_call_operand.vmem [shape: f32[8,256], index: 5, kind: input, shape index: {}]
  %s6 = inlined_call_operand.vmem [shape: f32[1024,32], index: 6, kind: input, shape index: {}]
  %s7 = inlined_call_operand.hbm [shape: f32[2,1024,256], index: 7, kind: output, shape index: {}]
  %s8 = sld [smem:[#allocation0]]
  $region61: #{_lambda_.1} parent=0
    _
  %s10 = ssub.s32 1, %s8
  %s11 = scalar_select 0, %s10, %s8
  $region1: #{_lambda_.1} parent=0
    #allocation3 [shape = 'u8[2097152]{0}', space=vmem, size = 0x200000, scoped, tag = 'output window, operand 0']
    #allocation4 [shape = 's32[2]{0}', space=sflag, size = 0x8, scoped, tag = 'scoped memory for _lambda_.1']
    %12 = vsyncpa [#allocation4], 0
    %s13 = scalar_lea.sflag [#allocation4], 1
    %14 = vsyncpa %s13, 0
    loop: start=0, step=1, limit=4
    $region2: #{_lambda_.1} parent=1 // loop_pre_header
      _
    $region3: #{_lambda_.1} parent=1 // loop_header
      %s16 = sphi 0, %s20
      %p17 = scmp.ge.s32.totalorder %s16, 4
      %s26 = sphi 0, %s28
      %s29 = sphi 0, %s26
      %s30 = sphi 0, %s29
      %s46 = sphi 0, %s30
      %s50 = sphi 0, %s50
      %s52 = sphi 0, %s50
      %s53 = sphi 0, %s52
      %s67 = sphi 0, %s53
      %s71 = sphi 0, %s71
      %s73 = sphi 0, %s71
      %s74 = sphi 0, %s73
      %s88 = sphi 0, %s74
      %s92 = sphi 0, %s92
      %s94 = sphi 0, %s92
      %s95 = sphi 0, %s94
      %s109 = sphi 0, %s95
      %s113 = sphi 0, %s113
      %s115 = sphi 0, %s113
      %s116 = sphi 0, %s115
      %s130 = sphi 0, %s116
      %s134 = sphi 0, %s134
      %s136 = sphi 0, %s134
      %s137 = sphi 0, %s136
      %s151 = sphi 0, %s137
      %s155 = sphi 0, %s155
      %s157 = sphi 0, %s155
      %s158 = sphi 0, %s157
      %s172 = sphi 0, %s158
      %s178 = sphi 0, %s180
      %s181 = sphi 0, %s178
      %s182 = sphi 0, %s181
      %s198 = sphi 0, %s182
    $region4: #{_lambda_.1} parent=1 // loop_header_branch
      %19 = sbr.rel (%p17) target = $region8
    $region5: #{_lambda_.1} parent=1 // loop_body
      %s21 = ssub.s32 %s16, 1
      %s22 = ssub.s32 %s16, 2
      %s23 = sadd.s32 %s16, 1
      %s24 = ssub.s32 %s16, %s23
      %p25 = scmp.eq.s32.totalorder %s24, 0
      %s27 = sadd.s32 %s26, 1
      %s28 = scalar_select %p25, %s26, %s27
      %p31 = pneg %p25
      %p32 = scmp.eq.s32.totalorder %s16, 1
      %p33 = por %p31, %p32
      %p34 = scmp.ne.s32.totalorder %s26, %s29
      %p35 = scmp.eq.s32.totalorder %s16, 0
      %p36 = por %p34, %p35
      %p37 = scmp.ne.s32.totalorder %s26, %s29
      %p38 = scmp.eq.s32.totalorder %s21, 1
      %p39 = por %p37, %p38
      %p40 = scmp.ne.s32.totalorder %s29, %s30
      %p41 = scmp.eq.s32.totalorder %s21, 0
      %p42 = por %p40, %p41
      %p43 = scmp.ne.s32.totalorder %s29, %s30
      %p44 = scmp.eq.s32.totalorder %s22, 1
      %p45 = por %p43, %p44
      %p47 = scmp.ne.s32.totalorder %s30, %s46
      %p48 = scmp.eq.s32.totalorder %s22, 0
      %p49 = por %p47, %p48
      %s51 = sadd.s32 %s50, 1
      %p54 = scmp.eq.s32.totalorder %s16, 1
      %p55 = scmp.ne.s32.totalorder %s50, %s52
      %p56 = scmp.eq.s32.totalorder %s16, 0
      %p57 = por %p55, %p56
      %p58 = scmp.ne.s32.totalorder %s50, %s52
      %p59 = scmp.eq.s32.totalorder %s21, 1
      %p60 = por %p58, %p59
      %p61 = scmp.ne.s32.totalorder %s52, %s53
      %p62 = scmp.eq.s32.totalorder %s21, 0
      %p63 = por %p61, %p62
      %p64 = scmp.ne.s32.totalorder %s52, %s53
      %p65 = scmp.eq.s32.totalorder %s22, 1
      %p66 = por %p64, %p65
      %p68 = scmp.ne.s32.totalorder %s53, %s67
      %p69 = scmp.eq.s32.totalorder %s22, 0
      %p70 = por %p68, %p69
      %s72 = sadd.s32 %s71, 1
      %p75 = scmp.eq.s32.totalorder %s16, 1
      %p76 = scmp.ne.s32.totalorder %s71, %s73
      %p77 = scmp.eq.s32.totalorder %s16, 0
      %p78 = por %p76, %p77
      %p79 = scmp.ne.s32.totalorder %s71, %s73
      %p80 = scmp.eq.s32.totalorder %s21, 1
      %p81 = por %p79, %p80
      %p82 = scmp.ne.s32.totalorder %s73, %s74
      %p83 = scmp.eq.s32.totalorder %s21, 0
      %p84 = por %p82, %p83
      %p85 = scmp.ne.s32.totalorder %s73, %s74
      %p86 = scmp.eq.s32.totalorder %s22, 1
      %p87 = por %p85, %p86
      %p89 = scmp.ne.s32.totalorder %s74, %s88
      %p90 = scmp.eq.s32.totalorder %s22, 0
      %p91 = por %p89, %p90
      %s93 = sadd.s32 %s92, 1
      %p96 = scmp.eq.s32.totalorder %s16, 1
      %p97 = scmp.ne.s32.totalorder %s92, %s94
      %p98 = scmp.eq.s32.totalorder %s16, 0
      %p99 = por %p97, %p98
      %p100 = scmp.ne.s32.totalorder %s92, %s94
      %p101 = scmp.eq.s32.totalorder %s21, 1
      %p102 = por %p100, %p101
      %p103 = scmp.ne.s32.totalorder %s94, %s95
      %p104 = scmp.eq.s32.totalorder %s21, 0
      %p105 = por %p103, %p104
      %p106 = scmp.ne.s32.totalorder %s94, %s95
      %p107 = scmp.eq.s32.totalorder %s22, 1
      %p108 = por %p106, %p107
      %p110 = scmp.ne.s32.totalorder %s95, %s109
      %p111 = scmp.eq.s32.totalorder %s22, 0
      %p112 = por %p110, %p111
      %s114 = sadd.s32 %s113, 1
      %p117 = scmp.eq.s32.totalorder %s16, 1
      %p118 = scmp.ne.s32.totalorder %s113, %s115
      %p119 = scmp.eq.s32.totalorder %s16, 0
      %p120 = por %p118, %p119
      %p121 = scmp.ne.s32.totalorder %s113, %s115
      %p122 = scmp.eq.s32.totalorder %s21, 1
      %p123 = por %p121, %p122
      %p124 = scmp.ne.s32.totalorder %s115, %s116
      %p125 = scmp.eq.s32.totalorder %s21, 0
      %p126 = por %p124, %p125
      %p127 = scmp.ne.s32.totalorder %s115, %s116
      %p128 = scmp.eq.s32.totalorder %s22, 1
      %p129 = por %p127, %p128
      %p131 = scmp.ne.s32.totalorder %s116, %s130
      %p132 = scmp.eq.s32.totalorder %s22, 0
      %p133 = por %p131, %p132
      %s135 = sadd.s32 %s134, 1
      %p138 = scmp.eq.s32.totalorder %s16, 1
      %p139 = scmp.ne.s32.totalorder %s134, %s136
      %p140 = scmp.eq.s32.totalorder %s16, 0
      %p141 = por %p139, %p140
      %p142 = scmp.ne.s32.totalorder %s134, %s136
      %p143 = scmp.eq.s32.totalorder %s21, 1
      %p144 = por %p142, %p143
      %p145 = scmp.ne.s32.totalorder %s136, %s137
      %p146 = scmp.eq.s32.totalorder %s21, 0
      %p147 = por %p145, %p146
      %p148 = scmp.ne.s32.totalorder %s136, %s137
      %p149 = scmp.eq.s32.totalorder %s22, 1
      %p150 = por %p148, %p149
      %p152 = scmp.ne.s32.totalorder %s137, %s151
      %p153 = scmp.eq.s32.totalorder %s22, 0
      %p154 = por %p152, %p153
      %s156 = sadd.s32 %s155, 1
      %p159 = scmp.eq.s32.totalorder %s16, 1
      %p160 = scmp.ne.s32.totalorder %s155, %s157
      %p161 = scmp.eq.s32.totalorder %s16, 0
      %p162 = por %p160, %p161
      %p163 = scmp.ne.s32.totalorder %s155, %s157
      %p164 = scmp.eq.s32.totalorder %s21, 1
      %p165 = por %p163, %p164
      %p166 = scmp.ne.s32.totalorder %s157, %s158
      %p167 = scmp.eq.s32.totalorder %s21, 0
      %p168 = por %p166, %p167
      %p169 = scmp.ne.s32.totalorder %s157, %s158
      %p170 = scmp.eq.s32.totalorder %s22, 1
      %p171 = por %p169, %p170
      %p173 = scmp.ne.s32.totalorder %s158, %s172
      %p174 = scmp.eq.s32.totalorder %s22, 0
      %p175 = por %p173, %p174
      %s176 = ssub.s32 %s16, %s23
      %p177 = scmp.eq.s32.totalorder %s176, 0
      %s179 = sadd.s32 %s178, 1
      %s180 = scalar_select %p177, %s178, %s179
      %p183 = pneg %p177
      %p184 = scmp.eq.s32.totalorder %s16, 1
      %p185 = por %p183, %p184
      %p186 = scmp.ne.s32.totalorder %s178, %s181
      %p187 = scmp.eq.s32.totalorder %s16, 0
      %p188 = por %p186, %p187
      %p189 = scmp.ne.s32.totalorder %s178, %s181
      %p190 = scmp.eq.s32.totalorder %s21, 1
      %p191 = por %p189, %p190
      %p192 = scmp.ne.s32.totalorder %s181, %s182
      %p193 = scmp.eq.s32.totalorder %s21, 0
      %p194 = por %p192, %p193
      %p195 = scmp.ne.s32.totalorder %s181, %s182
      %p196 = scmp.eq.s32.totalorder %s22, 1
      %p197 = por %p195, %p196
      %p199 = scmp.ne.s32.totalorder %s182, %s198
      %p200 = scmp.eq.s32.totalorder %s22, 0
      %p201 = por %p199, %p200
      %p202 = scmp.le.s32.totalorder 1, %s16
      %p203 = scmp.lt.s32.totalorder %s16, 3
      %p204 = pnand %p202, %p203
      %p205 = pneg %p204
      // Predicated region
      $region9: #{_lambda_.1} parent=5 // pred_check
        _
      $region10: #{_lambda_.1} parent=5 // pred_check_branch
        %207 = sbr.rel (%p204) target = $region12
      $region11: #{_lambda_.1} parent=5 // pred_region
        %s208 = ssub.s32 %s16, 1
        // Predicated region
        $region13: #{_lambda_.1} parent=11 // pred_check
          %p209 = pneg %p63
        $region14: #{_lambda_.1} parent=11 // pred_check_branch
          %211 = sbr.rel (%p209) target = $region16
        $region15: #{_lambda_.1} parent=11 // pred_region
          _
        $region16: #{_lambda_.1} parent=11 // pred_fallthru
          _
        // Predicated region
        $region17: #{_lambda_.1} parent=11 // pred_check
          %p212 = pneg %p84
        $region18: #{_lambda_.1} parent=11 // pred_check_branch
          %214 = sbr.rel (%p212) target = $region20
        $region19: #{_lambda_.1} parent=11 // pred_region
          _
        $region20: #{_lambda_.1} parent=11 // pred_fallthru
          _
        // Predicated region
        $region21: #{_lambda_.1} parent=11 // pred_check
          %p215 = pneg %p105
        $region22: #{_lambda_.1} parent=11 // pred_check_branch
          %217 = sbr.rel (%p215) target = $region24
        $region23: #{_lambda_.1} parent=11 // pred_region
          _
        $region24: #{_lambda_.1} parent=11 // pred_fallthru
          _
        // Predicated region
        $region25: #{_lambda_.1} parent=11 // pred_check
          %p218 = pneg %p126
        $region26: #{_lambda_.1} parent=11 // pred_check_branch
          %220 = sbr.rel (%p218) target = $region28
        $region27: #{_lambda_.1} parent=11 // pred_region
          _
        $region28: #{_lambda_.1} parent=11 // pred_fallthru
          _
        // Predicated region
        $region29: #{_lambda_.1} parent=11 // pred_check
          %p221 = pneg %p147
        $region30: #{_lambda_.1} parent=11 // pred_check_branch
          %223 = sbr.rel (%p221) target = $region32
        $region31: #{_lambda_.1} parent=11 // pred_region
          _
        $region32: #{_lambda_.1} parent=11 // pred_fallthru
          _
        // Predicated region
        $region33: #{_lambda_.1} parent=11 // pred_check
          %p224 = pneg %p168
        $region34: #{_lambda_.1} parent=11 // pred_check_branch
          %226 = sbr.rel (%p224) target = $region36
        $region35: #{_lambda_.1} parent=11 // pred_region
          _
        $region36: #{_lambda_.1} parent=11 // pred_fallthru
          _
      $region12: #{_lambda_.1} parent=5 // pred_fallthru
        _
      %p227 = scmp.lt.s32.totalorder %s16, 2
      // Predicated region
      $region37: #{_lambda_.1} parent=5 // pred_check
        %p228 = pneg %p227
      $region38: #{_lambda_.1} parent=5 // pred_check_branch
        %230 = sbr.rel (%p228) target = $region40
      $region39: #{_lambda_.1} parent=5 // pred_region
        // Predicated region
        $region41: #{_lambda_.1} parent=39 // pred_check
          %p231 = pneg %p36
        $region42: #{_lambda_.1} parent=39 // pred_check_branch
          %233 = sbr.rel (%p231) target = $region44
        $region43: #{_lambda_.1} parent=39 // pred_region
          %p234 = scmp.lt.s32.totalorder %s16, 1
          %s235 = scalar_select %p234, %s16, 1
          %s236 = smul.addr %s235, 18
          %s237 = smul.addr %s236, 8
          %s238 = scalar_lea.vmem %s0, %s237
        $region44: #{_lambda_.1} parent=39 // pred_fallthru
          _
      $region40: #{_lambda_.1} parent=5 // pred_fallthru
        _
      %p239 = scmp.le.s32.totalorder 1, %s16
      %p240 = scmp.lt.s32.totalorder %s16, 3
      %p241 = pnand %p239, %p240
      %p242 = pneg %p241
      // Predicated region
      $region45: #{_lambda_.1} parent=5 // pred_check
        _
      $region46: #{_lambda_.1} parent=5 // pred_check_branch
        %244 = sbr.rel (%p241) target = $region48
      $region47: #{_lambda_.1} parent=5 // pred_region
        %s245 = ssub.s32 %s16, 1
        %p246 = scmp.lt.s32.totalorder %s21, 1
        %s247 = scalar_select %p246, %s21, 1
        %s248 = smul.addr %s247, 18
        %s249 = smul.addr %s248, 8
        %s250 = scalar_lea.vmem %s0, %s249
        %p251 = pneg %p42
        %p252 = pneg %p39
        %p253 = pneg %p63
        %p254 = pneg %p60
        %p255 = pneg %p84
        %p256 = pneg %p81
        %p257 = pneg %p105
        %p258 = pneg %p102
        %p259 = pneg %p126
        %p260 = pneg %p123
        %p261 = pneg %p147
        %p262 = pneg %p144
        %p263 = pneg %p168
        %p264 = pneg %p165
        %p265 = pneg %p194
        %p266 = pneg %p191
        %s267 = sand.u32 %s181, 1
        %s268 = scalar_lea.sflag [#allocation4], %s267
        %s269 = sand.u32 %s181, 1
        %s270 = smul.addr %s269, 2048
        %s271 = scalar_lea.vmem [#allocation3], %s270
        %p272 = scmp.lt.s32.totalorder %s21, 1
        %s273 = scalar_select %p272, %s21, 1
        %s274 = smul.addr %s273, 18
        %s275 = smul.addr %s274, 8
        %s276 = scalar_lea.vmem %s0, %s275
        %v277 = vld [vmem:[%s1] sm:$0xff]
        %v278 = vld [vmem:[%s1 + $0x8] sm:$0xff]
        %v279 = vld [vmem:[%s1 + $0x10] sm:$0xff]
        %v280 = vld [vmem:[%s1 + $0x18] sm:$0xff]
        %v281 = vld [vmem:[%s1 + $0x20] sm:$0xff]
        %v282 = vld [vmem:[%s1 + $0x28] sm:$0xff]
        %v283 = vld [vmem:[%s1 + $0x30] sm:$0xff]
        %v284 = vld [vmem:[%s1 + $0x38] sm:$0xff]
        %v285 = vld [vmem:[%s276] sm:$0xff]
        %v286 = vld [vmem:[%s276 + $0x8] sm:$0xff]
        %v287 = vld [vmem:[%s276 + $0x10] sm:$0xff]
        %v288 = vld [vmem:[%s276 + $0x18] sm:$0xff]
        %v289 = vld [vmem:[%s276 + $0x20] sm:$0xff]
        %v290 = vld [vmem:[%s276 + $0x28] sm:$0xff]
        %v291 = vld [vmem:[%s276 + $0x30] sm:$0xff]
        %v292 = vld [vmem:[%s276 + $0x38] sm:$0xff]
        %v293 = vld [vmem:[%s276 + $0x40] sm:$0xff]
        %v294 = vld [vmem:[%s276 + $0x48] sm:$0xff]
        %v295 = vld [vmem:[%s276 + $0x50] sm:$0xff]
        %v296 = vld [vmem:[%s276 + $0x58] sm:$0xff]
        %v297 = vld [vmem:[%s276 + $0x60] sm:$0xff]
        %v298 = vld [vmem:[%s276 + $0x68] sm:$0xff]
        %v299 = vld [vmem:[%s276 + $0x70] sm:$0xff]
        %v300 = vld [vmem:[%s276 + $0x78] sm:$0xff]
        %v301 = vld [vmem:[%s276 + $0x80] sm:$0xff]
        %v302 = vld [vmem:[%s276 + $0x88] sm:$0xff]
        %v303 = vld [vmem:[%s2] sm:$0xff]
        %v304 = vld [vmem:[%s2 + $0x8] sm:$0xff]
        %v305 = vld [vmem:[%s2 + $0x10] sm:$0xff]
        %v306 = vld [vmem:[%s2 + $0x18] sm:$0xff]
        %308 = vset.pattern.permute.xlu0 0
        %309 = vperm.xlu0 %308, %v303
        %v310 = vpop.permute.xlu0 %309
        %313 = vset.pattern.permute.xlu0 0
        %314 = vperm.xlu0 %313, %v304
        %v315 = vpop.permute.xlu0 %314
        %318 = vset.pattern.permute.xlu0 0
        %319 = vperm.xlu0 %318, %v305
        %v320 = vpop.permute.xlu0 %319
        %323 = vset.pattern.permute.xlu0 0
        %324 = vperm.xlu0 %323, %v306
        %v325 = vpop.permute.xlu0 %324
        %vm327 = vcmask 130048
        %v329 = vsel %vm327, %v278, 0
        %v332 = vsel %vm327, %v280, 0
        %v335 = vsel %vm327, %v282, 0
        %v338 = vsel %vm327, %v284, 0
        %340 = vmatprep.subr.mxu0 0.0
        %341 = vmatpush1.msra.mxu0 %v300
        %342 = vmatprep.subr.mxu0 0.0
        %343 = vmatpush1.msra.mxu0 %v299
        %344 = vmatprep.subr.mxu0 0.0
        %345 = vmatpush1.msra.mxu0 %v298
        %346 = vmatprep.subr.mxu0 0.0
        %347 = vmatpush1.msra.mxu0 %v297
        %348 = vmatprep.subr.mxu0 0.0
        %349 = vmatpush1.msra.mxu0 %v296
        %350 = vmatprep.subr.mxu0 0.0
        %351 = vmatpush1.msra.mxu0 %v295
        %352 = vmatprep.subr.mxu0 0.0
        %353 = vmatpush1.msra.mxu0 %v294
        %354 = vmatprep.subr.mxu0 0.0
        %355 = vmatpush1.msra.mxu0 %v293
        %356 = vmatprep.subr.mxu0 0.0
        %357 = vmatpush1.msra.mxu0 %v292
        %358 = vmatprep.subr.mxu0 0.0
        %359 = vmatpush1.msra.mxu0 %v291
        %360 = vmatprep.subr.mxu0 0.0
        %361 = vmatpush1.msra.mxu0 %v290
        %362 = vmatprep.subr.mxu0 0.0
        %363 = vmatpush1.msra.mxu0 %v289
        %364 = vmatprep.subr.mxu0 0.0
        %365 = vmatpush1.msra.mxu0 %v288
        %366 = vmatprep.subr.mxu0 0.0
        %367 = vmatpush1.msra.mxu0 %v287
        %368 = vmatprep.subr.mxu0 0.0
        %369 = vmatpush1.msra.mxu0 %v286
        %370 = vmatprep.subr.mxu0 0.0
        %371 = vmatpush1.msra.mxu0 %v285
        %372 = vmatprep.subr.mxu0 0.0
        %373 = vmatpush2.msra.mxu0 0.0
        %374 = vmatprep.subr.mxu0 0.0
        %375 = vmatpush2.msra.mxu0 0.0
        %376 = vmatprep.subr.mxu0 0.0
        %377 = vmatpush2.msra.mxu0 0.0
        %378 = vmatprep.subr.mxu0 0.0
        %379 = vmatpush2.msra.mxu0 0.0
        %380 = vmatprep.subr.mxu0 0.0
        %381 = vmatpush2.msra.mxu0 0.0
        %382 = vmatprep.subr.mxu0 0.0
        %383 = vmatpush2.msra.mxu0 0.0
        %384 = vmatprep.subr.mxu0 0.0
        %385 = vmatpush2.msra.mxu0 0.0
        %386 = vmatprep.subr.mxu0 0.0
        %387 = vmatpush2.msra.mxu0 0.0
        %388 = vmatprep.subr.mxu0 0.0
        %389 = vmatpush2.msra.mxu0 0.0
        %390 = vmatprep.subr.mxu0 0.0
        %391 = vmatpush2.msra.mxu0 0.0
        %392 = vmatprep.subr.mxu0 0.0
        %393 = vmatpush2.msra.mxu0 0.0
        %394 = vmatprep.subr.mxu0 0.0
        %395 = vmatpush2.msra.mxu0 0.0
        %396 = vmatprep.subr.mxu0 0.0
        %397 = vmatpush2.msra.mxu0 0.0
        %398 = vmatprep.subr.mxu0 0.0
        %399 = vmatpush2.msra.mxu0 0.0
        %400 = vmatprep.subr.mxu0 0.0
        %401 = vmatpush2.msra.mxu0 %v302
        %402 = vmatprep.subr.mxu0 0.0
        %403 = vmatpush2.msra.mxu0 %v301
        %404 = vmatprep.mubr.f32.mxu0 %v329
        %405 = vmatmul.mubr.f32.gmra.mxu0 %v277
        %v406 = vpop.f32.mrf.mxu0
        %v407 = vadd.f32 %v310, %v406
        %v408 = vpop.f32.mrf.mxu0
        %409 = vmatprep.mubr.f32.mxu0 %v332
        %410 = vmatmul.mubr.f32.gmra.mxu0 %v279
        %v411 = vpop.f32.mrf.mxu0
        %v412 = vadd.f32 %v315, %v411
        %v413 = vpop.f32.mrf.mxu0
        %414 = vmatprep.mubr.f32.mxu0 %v335
        %415 = vmatmul.mubr.f32.gmra.mxu0 %v281
        %v416 = vpop.f32.mrf.mxu0
        %v417 = vadd.f32 %v320, %v416
        %v418 = vpop.f32.mrf.mxu0
        %419 = vmatprep.mubr.f32.mxu0 %v338
        %420 = vmatmul.mubr.f32.gmra.mxu0 %v283
        %v421 = vpop.f32.mrf.mxu0
        %v422 = vadd.f32 %v325, %v421
        %v423 = vpop.f32.mrf.mxu0
        %424 = vdwg.mxu0
        %v425 = vmax.f32 %v407, 0.0
        %v426 = vmax.f32 %v412, 0.0
        %v427 = vmax.f32 %v417, 0.0
        %v428 = vmax.f32 %v422, 0.0
        %v429 = vld [vmem:[%s3] sm:$0xf]
        %v430 = vld [vmem:[%s4] sm:$0xf]
        %432 = vset.pattern.permute.xlu0 0
        %433 = vperm.xlu0 %432, %v430
        %v434 = vpop.permute.xlu0 %433
        %vm436 = vcmask 261120
        %v438 = vsel %vm436, %v429, 0
        %440 = vmatprep.subr.mxu0 0.0
        %441 = vmatpush1.msra.mxu0 0.0
        %442 = vmatprep.subr.mxu0 0.0
        %443 = vmatpush1.msra.mxu0 0.0
        %444 = vmatprep.subr.mxu0 0.0
        %445 = vmatpush1.msra.mxu0 0.0
        %446 = vmatprep.subr.mxu0 0.0
        %447 = vmatpush1.msra.mxu0 0.0
        %448 = vmatprep.subr.mxu0 0.0
        %449 = vmatpush1.msra.mxu0 0.0
        %450 = vmatprep.subr.mxu0 0.0
        %451 = vmatpush1.msra.mxu0 0.0
        %452 = vmatprep.subr.mxu0 0.0
        %453 = vmatpush1.msra.mxu0 0.0
        %454 = vmatprep.subr.mxu0 0.0
        %455 = vmatpush1.msra.mxu0 0.0
        %456 = vmatprep.subr.mxu0 0.0
        %457 = vmatpush1.msra.mxu0 0.0
        %458 = vmatprep.subr.mxu0 0.0
        %459 = vmatpush1.msra.mxu0 0.0
        %460 = vmatprep.subr.mxu0 0.0
        %461 = vmatpush1.msra.mxu0 0.0
        %462 = vmatprep.subr.mxu0 0.0
        %463 = vmatpush1.msra.mxu0 0.0
        %464 = vmatprep.subr.mxu0 0.0
        %465 = vmatpush1.msra.mxu0 %v428
        %466 = vmatprep.subr.mxu0 0.0
        %467 = vmatpush1.msra.mxu0 %v427
        %468 = vmatprep.subr.mxu0 0.0
        %469 = vmatpush1.msra.mxu0 %v426
        %470 = vmatprep.subr.mxu0 0.0
        %471 = vmatpush1.msra.mxu0 %v425
        %472 = vmatprep.subr.mxu0 0.0
        %473 = vmatpush2.msra.mxu0 0.0
        %474 = vmatprep.subr.mxu0 0.0
        %475 = vmatpush2.msra.mxu0 0.0
        %476 = vmatprep.subr.mxu0 0.0
        %477 = vmatpush2.msra.mxu0 0.0
        %478 = vmatprep.subr.mxu0 0.0
        %479 = vmatpush2.msra.mxu0 0.0
        %480 = vmatprep.subr.mxu0 0.0
        %481 = vmatpush2.msra.mxu0 0.0
        %482 = vmatprep.subr.mxu0 0.0
        %483 = vmatpush2.msra.mxu0 0.0
        %484 = vmatprep.subr.mxu0 0.0
        %485 = vmatpush2.msra.mxu0 0.0
        %486 = vmatprep.subr.mxu0 0.0
        %487 = vmatpush2.msra.mxu0 0.0
        %488 = vmatprep.subr.mxu0 0.0
        %489 = vmatpush2.msra.mxu0 0.0
        %490 = vmatprep.subr.mxu0 0.0
        %491 = vmatpush2.msra.mxu0 0.0
        %492 = vmatprep.subr.mxu0 0.0
        %493 = vmatpush2.msra.mxu0 0.0
        %494 = vmatprep.subr.mxu0 0.0
        %495 = vmatpush2.msra.mxu0 0.0
        %496 = vmatprep.subr.mxu0 0.0
        %497 = vmatpush2.msra.mxu0 0.0
        %498 = vmatprep.subr.mxu0 0.0
        %499 = vmatpush2.msra.mxu0 0.0
        %500 = vmatprep.subr.mxu0 0.0
        %501 = vmatpush2.msra.mxu0 0.0
        %502 = vmatprep.subr.mxu0 0.0
        %503 = vmatpush2.msra.mxu0 0.0
        %504 = vmatprep.mubr.f32.mxu0 0.0
        %505 = vmatmul.mubr.f32.gmra.mxu0 %v438
        %v506 = vpop.f32.mrf.mxu0
        %v507 = vadd.f32 %v434, %v506
        %v508 = vpop.f32.mrf.mxu0
        %509 = vdwg.mxu0
        %v510 = vld [vmem:[%s5] sm:$0xff]
        %v511 = vld [vmem:[%s5 + $0x8] sm:$0xff]
        %vm512 = vcmask 64512
        %v514 = vsel %vm512, %v507, 0
        %516 = vmatprep.subr.mxu0 0.0
        %517 = vmatpush1.msra.mxu0 0.0
        %518 = vmatprep.subr.mxu0 0.0
        %519 = vmatpush1.msra.mxu0 0.0
        %520 = vmatprep.subr.mxu0 0.0
        %521 = vmatpush1.msra.mxu0 0.0
        %522 = vmatprep.subr.mxu0 0.0
        %523 = vmatpush1.msra.mxu0 0.0
        %524 = vmatprep.subr.mxu0 0.0
        %525 = vmatpush1.msra.mxu0 0.0
        %526 = vmatprep.subr.mxu0 0.0
        %527 = vmatpush1.msra.mxu0 0.0
        %528 = vmatprep.subr.mxu0 0.0
        %529 = vmatpush1.msra.mxu0 0.0
        %530 = vmatprep.subr.mxu0 0.0
        %531 = vmatpush1.msra.mxu0 0.0
        %532 = vmatprep.subr.mxu0 0.0
        %533 = vmatpush1.msra.mxu0 0.0
        %534 = vmatprep.subr.mxu0 0.0
        %535 = vmatpush1.msra.mxu0 0.0
        %536 = vmatprep.subr.mxu0 0.0
        %537 = vmatpush1.msra.mxu0 0.0
        %538 = vmatprep.subr.mxu0 0.0
        %539 = vmatpush1.msra.mxu0 0.0
        %540 = vmatprep.subr.mxu0 0.0
        %541 = vmatpush1.msra.mxu0 0.0
        %542 = vmatprep.subr.mxu0 0.0
        %543 = vmatpush1.msra.mxu0 0.0
        %544 = vmatprep.subr.mxu0 0.0
        %545 = vmatpush1.msra.mxu0 0.0
        %546 = vmatprep.subr.mxu0 %v511
        %547 = vmatpush1.msra.mxu0 %v510
        %548 = vmatprep.subr.mxu0 0.0
        %549 = vmatpush2.msra.mxu0 0.0
        %550 = vmatprep.subr.mxu0 0.0
        %551 = vmatpush2.msra.mxu0 0.0
        %552 = vmatprep.subr.mxu0 0.0
        %553 = vmatpush2.msra.mxu0 0.0
        %554 = vmatprep.subr.mxu0 0.0
        %555 = vmatpush2.msra.mxu0 0.0
        %556 = vmatprep.subr.mxu0 0.0
        %557 = vmatpush2.msra.mxu0 0.0
        %558 = vmatprep.subr.mxu0 0.0
        %559 = vmatpush2.msra.mxu0 0.0
        %560 = vmatprep.subr.mxu0 0.0
        %561 = vmatpush2.msra.mxu0 0.0
        %562 = vmatprep.subr.mxu0 0.0
        %563 = vmatpush2.msra.mxu0 0.0
        %564 = vmatprep.subr.mxu0 0.0
        %565 = vmatpush2.msra.mxu0 0.0
        %566 = vmatprep.subr.mxu0 0.0
        %567 = vmatpush2.msra.mxu0 0.0
        %568 = vmatprep.subr.mxu0 0.0
        %569 = vmatpush2.msra.mxu0 0.0
        %570 = vmatprep.subr.mxu0 0.0
        %571 = vmatpush2.msra.mxu0 0.0
        %572 = vmatprep.subr.mxu0 0.0
        %573 = vmatpush2.msra.mxu0 0.0
        %574 = vmatprep.subr.mxu0 0.0
        %575 = vmatpush2.msra.mxu0 0.0
        %576 = vmatprep.subr.mxu0 0.0
        %577 = vmatpush2.msra.mxu0 0.0
        %578 = vmatprep.subr.mxu0 0.0
        %579 = vmatpush2.msra.mxu0 0.0
        %580 = vmatprep.mubr.f32.mxu0 0.0
        %581 = vmatmul.mubr.f32.gmra.mxu0 %v514
        %v582 = vpop.f32.mrf.mxu0
        %v583 = vadd.f32 0.0, %v582
        %v584 = vpop.f32.mrf.mxu0
        %v585 = vadd.f32 0.0, %v584
        %586 = vdwg.mxu0
        %587 = vst [vmem:[#allocation2] sm:$0xf] %v583
        %588 = vst [vmem:[#allocation2 + $0x8] sm:$0xf] %v585
        %v589 = vld [vmem:[%s5] sm:$0xff]
        %v590 = vld [vmem:[%s5 + $0x8] sm:$0xff]
        %591 = vrot.lane.b32.xlu0 %v507, 120
        %v592 = vpop.permute.xlu0 %591
        %v593 = vsel %vm512, %v592, 0
        %595 = vmatprep.subr.mxu0 0.0
        %596 = vmatpush1.msra.mxu0 0.0
        %597 = vmatprep.subr.mxu0 0.0
        %598 = vmatpush1.msra.mxu0 0.0
        %599 = vmatprep.subr.mxu0 0.0
        %600 = vmatpush1.msra.mxu0 0.0
        %601 = vmatprep.subr.mxu0 0.0
        %602 = vmatpush1.msra.mxu0 0.0
        %603 = vmatprep.subr.mxu0 0.0
        %604 = vmatpush1.msra.mxu0 0.0
        %605 = vmatprep.subr.mxu0 0.0
        %606 = vmatpush1.msra.mxu0 0.0
        %607 = vmatprep.subr.mxu0 0.0
        %608 = vmatpush1.msra.mxu0 0.0
        %609 = vmatprep.subr.mxu0 0.0
        %610 = vmatpush1.msra.mxu0 0.0
        %611 = vmatprep.subr.mxu0 0.0
        %612 = vmatpush1.msra.mxu0 0.0
        %613 = vmatprep.subr.mxu0 0.0
        %614 = vmatpush1.msra.mxu0 0.0
        %615 = vmatprep.subr.mxu0 0.0
        %616 = vmatpush1.msra.mxu0 0.0
        %617 = vmatprep.subr.mxu0 0.0
        %618 = vmatpush1.msra.mxu0 0.0
        %619 = vmatprep.subr.mxu0 0.0
        %620 = vmatpush1.msra.mxu0 0.0
        %621 = vmatprep.subr.mxu0 0.0
        %622 = vmatpush1.msra.mxu0 0.0
        %623 = vmatprep.subr.mxu0 0.0
        %624 = vmatpush1.msra.mxu0 0.0
        %625 = vmatprep.subr.mxu0 %v590
        %626 = vmatpush1.msra.mxu0 %v589
        %627 = vmatprep.subr.mxu0 0.0
        %628 = vmatpush2.msra.mxu0 0.0
        %629 = vmatprep.subr.mxu0 0.0
        %630 = vmatpush2.msra.mxu0 0.0
        %631 = vmatprep.subr.mxu0 0.0
        %632 = vmatpush2.msra.mxu0 0.0
        %633 = vmatprep.subr.mxu0 0.0
        %634 = vmatpush2.msra.mxu0 0.0
        %635 = vmatprep.subr.mxu0 0.0
        %636 = vmatpush2.msra.mxu0 0.0
        %637 = vmatprep.subr.mxu0 0.0
        %638 = vmatpush2.msra.mxu0 0.0
        %639 = vmatprep.subr.mxu0 0.0
        %640 = vmatpush2.msra.mxu0 0.0
        %641 = vmatprep.subr.mxu0 0.0
        %642 = vmatpush2.msra.mxu0 0.0
        %643 = vmatprep.subr.mxu0 0.0
        %644 = vmatpush2.msra.mxu0 0.0
        %645 = vmatprep.subr.mxu0 0.0
        %646 = vmatpush2.msra.mxu0 0.0
        %647 = vmatprep.subr.mxu0 0.0
        %648 = vmatpush2.msra.mxu0 0.0
        %649 = vmatprep.subr.mxu0 0.0
        %650 = vmatpush2.msra.mxu0 0.0
        %651 = vmatprep.subr.mxu0 0.0
        %652 = vmatpush2.msra.mxu0 0.0
        %653 = vmatprep.subr.mxu0 0.0
        %654 = vmatpush2.msra.mxu0 0.0
        %655 = vmatprep.subr.mxu0 0.0
        %656 = vmatpush2.msra.mxu0 0.0
        %657 = vmatprep.subr.mxu0 0.0
        %658 = vmatpush2.msra.mxu0 0.0
        %659 = vmatprep.mubr.f32.mxu0 0.0
        %660 = vmatmul.mubr.f32.gmra.mxu0 %v593
        %v661 = vpop.f32.mrf.mxu0
        %v662 = vadd.f32 0.0, %v661
        %v663 = vpop.f32.mrf.mxu0
        %v664 = vadd.f32 0.0, %v663
        %665 = vdwg.mxu0
        %v668 = vrot.slane %v662, 4
        %v669 = vrot.slane %v664, 4
        %672 = vst [vmem:[#allocation2] sm:$0xf0] %v668
        %673 = vst [vmem:[#allocation2 + $0x8] sm:$0xf0] %v669
        %v674 = vld [vmem:[%s5] sm:$0xff]
        %v675 = vld [vmem:[%s5 + $0x8] sm:$0xff]
        %676 = vrot.lane.b32.xlu0 %v507, 112
        %v677 = vpop.permute.xlu0 %676
        %v678 = vsel %vm512, %v677, 0
        %680 = vmatprep.subr.mxu0 0.0
        %681 = vmatpush1.msra.mxu0 0.0
        %682 = vmatprep.subr.mxu0 0.0
        %683 = vmatpush1.msra.mxu0 0.0
        %684 = vmatprep.subr.mxu0 0.0
        %685 = vmatpush1.msra.mxu0 0.0
        %686 = vmatprep.subr.mxu0 0.0
        %687 = vmatpush1.msra.mxu0 0.0
        %688 = vmatprep.subr.mxu0 0.0
        %689 = vmatpush1.msra.mxu0 0.0
        %690 = vmatprep.subr.mxu0 0.0
        %691 = vmatpush1.msra.mxu0 0.0
        %692 = vmatprep.subr.mxu0 0.0
        %693 = vmatpush1.msra.mxu0 0.0
        %694 = vmatprep.subr.mxu0 0.0
        %695 = vmatpush1.msra.mxu0 0.0
        %696 = vmatprep.subr.mxu0 0.0
        %697 = vmatpush1.msra.mxu0 0.0
        %698 = vmatprep.subr.mxu0 0.0
        %699 = vmatpush1.msra.mxu0 0.0
        %700 = vmatprep.subr.mxu0 0.0
        %701 = vmatpush1.msra.mxu0 0.0
        %702 = vmatprep.subr.mxu0 0.0
        %703 = vmatpush1.msra.mxu0 0.0
        %704 = vmatprep.subr.mxu0 0.0
        %705 = vmatpush1.msra.mxu0 0.0
        %706 = vmatprep.subr.mxu0 0.0
        %707 = vmatpush1.msra.mxu0 0.0
        %708 = vmatprep.subr.mxu0 0.0
        %709 = vmatpush1.msra.mxu0 0.0
        %710 = vmatprep.subr.mxu0 %v675
        %711 = vmatpush1.msra.mxu0 %v674
        %712 = vmatprep.subr.mxu0 0.0
        %713 = vmatpush2.msra.mxu0 0.0
        %714 = vmatprep.subr.mxu0 0.0
        %715 = vmatpush2.msra.mxu0 0.0
        %716 = vmatprep.subr.mxu0 0.0
        %717 = vmatpush2.msra.mxu0 0.0
        %718 = vmatprep.subr.mxu0 0.0
        %719 = vmatpush2.msra.mxu0 0.0
        %720 = vmatprep.subr.mxu0 0.0
        %721 = vmatpush2.msra.mxu0 0.0
        %722 = vmatprep.subr.mxu0 0.0
        %723 = vmatpush2.msra.mxu0 0.0
        %724 = vmatprep.subr.mxu0 0.0
        %725 = vmatpush2.msra.mxu0 0.0
        %726 = vmatprep.subr.mxu0 0.0
        %727 = vmatpush2.msra.mxu0 0.0
        %728 = vmatprep.subr.mxu0 0.0
        %729 = vmatpush2.msra.mxu0 0.0
        %730 = vmatprep.subr.mxu0 0.0
        %731 = vmatpush2.msra.mxu0 0.0
        %732 = vmatprep.subr.mxu0 0.0
        %733 = vmatpush2.msra.mxu0 0.0
        %734 = vmatprep.subr.mxu0 0.0
        %735 = vmatpush2.msra.mxu0 0.0
        %736 = vmatprep.subr.mxu0 0.0
        %737 = vmatpush2.msra.mxu0 0.0
        %738 = vmatprep.subr.mxu0 0.0
        %739 = vmatpush2.msra.mxu0 0.0
        %740 = vmatprep.subr.mxu0 0.0
        %741 = vmatpush2.msra.mxu0 0.0
        %742 = vmatprep.subr.mxu0 0.0
        %743 = vmatpush2.msra.mxu0 0.0
        %744 = vmatprep.mubr.f32.mxu0 0.0
        %745 = vmatmul.mubr.f32.gmra.mxu0 %v678
        %v746 = vpop.f32.mrf.mxu0
        %v747 = vadd.f32 0.0, %v746
        %v748 = vpop.f32.mrf.mxu0
        %v749 = vadd.f32 0.0, %v748
        %750 = vdwg.mxu0
        %751 = vst [vmem:[#allocation2 + $0x10] sm:$0xf] %v747
        %752 = vst [vmem:[#allocation2 + $0x18] sm:$0xf] %v749
        %v753 = vld [vmem:[%s5] sm:$0xff]
        %v754 = vld [vmem:[%s5 + $0x8] sm:$0xff]
        %755 = vrot.lane.b32.xlu0 %v507, 104
        %v756 = vpop.permute.xlu0 %755
        %v757 = vsel %vm512, %v756, 0
        %759 = vmatprep.subr.mxu0 0.0
        %760 = vmatpush1.msra.mxu0 0.0
        %761 = vmatprep.subr.mxu0 0.0
        %762 = vmatpush1.msra.mxu0 0.0
        %763 = vmatprep.subr.mxu0 0.0
        %764 = vmatpush1.msra.mxu0 0.0
        %765 = vmatprep.subr.mxu0 0.0
        %766 = vmatpush1.msra.mxu0 0.0
        %767 = vmatprep.subr.mxu0 0.0
        %768 = vmatpush1.msra.mxu0 0.0
        %769 = vmatprep.subr.mxu0 0.0
        %770 = vmatpush1.msra.mxu0 0.0
        %771 = vmatprep.subr.mxu0 0.0
        %772 = vmatpush1.msra.mxu0 0.0
        %773 = vmatprep.subr.mxu0 0.0
        %774 = vmatpush1.msra.mxu0 0.0
        %775 = vmatprep.subr.mxu0 0.0
        %776 = vmatpush1.msra.mxu0 0.0
        %777 = vmatprep.subr.mxu0 0.0
        %778 = vmatpush1.msra.mxu0 0.0
        %779 = vmatprep.subr.mxu0 0.0
        %780 = vmatpush1.msra.mxu0 0.0
        %781 = vmatprep.subr.mxu0 0.0
        %782 = vmatpush1.msra.mxu0 0.0
        %783 = vmatprep.subr.mxu0 0.0
        %784 = vmatpush1.msra.mxu0 0.0
        %785 = vmatprep.subr.mxu0 0.0
        %786 = vmatpush1.msra.mxu0 0.0
        %787 = vmatprep.subr.mxu0 0.0
        %788 = vmatpush1.msra.mxu0 0.0
        %789 = vmatprep.subr.mxu0 %v754
        %790 = vmatpush1.msra.mxu0 %v753
        %791 = vmatprep.subr.mxu0 0.0
        %792 = vmatpush2.msra.mxu0 0.0
        %793 = vmatprep.subr.mxu0 0.0
        %794 = vmatpush2.msra.mxu0 0.0
        %795 = vmatprep.subr.mxu0 0.0
        %796 = vmatpush2.msra.mxu0 0.0
        %797 = vmatprep.subr.mxu0 0.0
        %798 = vmatpush2.msra.mxu0 0.0
        %799 = vmatprep.subr.mxu0 0.0
        %800 = vmatpush2.msra.mxu0 0.0
        %801 = vmatprep.subr.mxu0 0.0
        %802 = vmatpush2.msra.mxu0 0.0
        %803 = vmatprep.subr.mxu0 0.0
        %804 = vmatpush2.msra.mxu0 0.0
        %805 = vmatprep.subr.mxu0 0.0
        %806 = vmatpush2.msra.mxu0 0.0
        %807 = vmatprep.subr.mxu0 0.0
        %808 = vmatpush2.msra.mxu0 0.0
        %809 = vmatprep.subr.mxu0 0.0
        %810 = vmatpush2.msra.mxu0 0.0
        %811 = vmatprep.subr.mxu0 0.0
        %812 = vmatpush2.msra.mxu0 0.0
        %813 = vmatprep.subr.mxu0 0.0
        %814 = vmatpush2.msra.mxu0 0.0
        %815 = vmatprep.subr.mxu0 0.0
        %816 = vmatpush2.msra.mxu0 0.0
        %817 = vmatprep.subr.mxu0 0.0
        %818 = vmatpush2.msra.mxu0 0.0
        %819 = vmatprep.subr.mxu0 0.0
        %820 = vmatpush2.msra.mxu0 0.0
        %821 = vmatprep.subr.mxu0 0.0
        %822 = vmatpush2.msra.mxu0 0.0
        %823 = vmatprep.mubr.f32.mxu0 0.0
        %824 = vmatmul.mubr.f32.gmra.mxu0 %v757
        %v825 = vpop.f32.mrf.mxu0
        %v826 = vadd.f32 0.0, %v825
        %v827 = vpop.f32.mrf.mxu0
        %v828 = vadd.f32 0.0, %v827
        %829 = vdwg.mxu0
        %v832 = vrot.slane %v826, 4
        %v833 = vrot.slane %v828, 4
        %836 = vst [vmem:[#allocation2 + $0x10] sm:$0xf0] %v832
        %837 = vst [vmem:[#allocation2 + $0x18] sm:$0xf0] %v833
        %v838 = vld [vmem:[%s5] sm:$0xff]
        %v839 = vld [vmem:[%s5 + $0x8] sm:$0xff]
        %840 = vrot.lane.b32.xlu0 %v507, 96
        %v841 = vpop.permute.xlu0 %840
        %v842 = vsel %vm512, %v841, 0
        %844 = vmatprep.subr.mxu0 0.0
        %845 = vmatpush1.msra.mxu0 0.0
        %846 = vmatprep.subr.mxu0 0.0
        %847 = vmatpush1.msra.mxu0 0.0
        %848 = vmatprep.subr.mxu0 0.0
        %849 = vmatpush1.msra.mxu0 0.0
        %850 = vmatprep.subr.mxu0 0.0
        %851 = vmatpush1.msra.mxu0 0.0
        %852 = vmatprep.subr.mxu0 0.0
        %853 = vmatpush1.msra.mxu0 0.0
        %854 = vmatprep.subr.mxu0 0.0
        %855 = vmatpush1.msra.mxu0 0.0
        %856 = vmatprep.subr.mxu0 0.0
        %857 = vmatpush1.msra.mxu0 0.0
        %858 = vmatprep.subr.mxu0 0.0
        %859 = vmatpush1.msra.mxu0 0.0
        %860 = vmatprep.subr.mxu0 0.0
        %861 = vmatpush1.msra.mxu0 0.0
        %862 = vmatprep.subr.mxu0 0.0
        %863 = vmatpush1.msra.mxu0 0.0
        %864 = vmatprep.subr.mxu0 0.0
        %865 = vmatpush1.msra.mxu0 0.0
        %866 = vmatprep.subr.mxu0 0.0
        %867 = vmatpush1.msra.mxu0 0.0
        %868 = vmatprep.subr.mxu0 0.0
        %869 = vmatpush1.msra.mxu0 0.0
        %870 = vmatprep.subr.mxu0 0.0
        %871 = vmatpush1.msra.mxu0 0.0
        %872 = vmatprep.subr.mxu0 0.0
        %873 = vmatpush1.msra.mxu0 0.0
        %874 = vmatprep.subr.mxu0 %v839
        %875 = vmatpush1.msra.mxu0 %v838
        %876 = vmatprep.subr.mxu0 0.0
        %877 = vmatpush2.msra.mxu0 0.0
        %878 = vmatprep.subr.mxu0 0.0
        %879 = vmatpush2.msra.mxu0 0.0
        %880 = vmatprep.subr.mxu0 0.0
        %881 = vmatpush2.msra.mxu0 0.0
        %882 = vmatprep.subr.mxu0 0.0
        %883 = vmatpush2.msra.mxu0 0.0
        %884 = vmatprep.subr.mxu0 0.0
        %885 = vmatpush2.msra.mxu0 0.0
        %886 = vmatprep.subr.mxu0 0.0
        %887 = vmatpush2.msra.mxu0 0.0
        %888 = vmatprep.subr.mxu0 0.0
        %889 = vmatpush2.msra.mxu0 0.0
        %890 = vmatprep.subr.mxu0 0.0
        %891 = vmatpush2.msra.mxu0 0.0
        %892 = vmatprep.subr.mxu0 0.0
        %893 = vmatpush2.msra.mxu0 0.0
        %894 = vmatprep.subr.mxu0 0.0
        %895 = vmatpush2.msra.mxu0 0.0
        %896 = vmatprep.subr.mxu0 0.0
        %897 = vmatpush2.msra.mxu0 0.0
        %898 = vmatprep.subr.mxu0 0.0
        %899 = vmatpush2.msra.mxu0 0.0
        %900 = vmatprep.subr.mxu0 0.0
        %901 = vmatpush2.msra.mxu0 0.0
        %902 = vmatprep.subr.mxu0 0.0
        %903 = vmatpush2.msra.mxu0 0.0
        %904 = vmatprep.subr.mxu0 0.0
        %905 = vmatpush2.msra.mxu0 0.0
        %906 = vmatprep.subr.mxu0 0.0
        %907 = vmatpush2.msra.mxu0 0.0
        %908 = vmatprep.mubr.f32.mxu0 0.0
        %909 = vmatmul.mubr.f32.gmra.mxu0 %v842
        %v910 = vpop.f32.mrf.mxu0
        %v911 = vadd.f32 0.0, %v910
        %v912 = vpop.f32.mrf.mxu0
        %v913 = vadd.f32 0.0, %v912
        %914 = vdwg.mxu0
        %915 = vst [vmem:[#allocation2 + $0x20] sm:$0xf] %v911
        %916 = vst [vmem:[#allocation2 + $0x28] sm:$0xf] %v913
        %v917 = vld [vmem:[%s5] sm:$0xff]
        %v918 = vld [vmem:[%s5 + $0x8] sm:$0xff]
        %919 = vrot.lane.b32.xlu0 %v507, 88
        %v920 = vpop.permute.xlu0 %919
        %v921 = vsel %vm512, %v920, 0
        %923 = vmatprep.subr.mxu0 0.0
        %924 = vmatpush1.msra.mxu0 0.0
        %925 = vmatprep.subr.mxu0 0.0
        %926 = vmatpush1.msra.mxu0 0.0
        %927 = vmatprep.subr.mxu0 0.0
        %928 = vmatpush1.msra.mxu0 0.0
        %929 = vmatprep.subr.mxu0 0.0
        %930 = vmatpush1.msra.mxu0 0.0
        %931 = vmatprep.subr.mxu0 0.0
        %932 = vmatpush1.msra.mxu0 0.0
        %933 = vmatprep.subr.mxu0 0.0
        %934 = vmatpush1.msra.mxu0 0.0
        %935 = vmatprep.subr.mxu0 0.0
        %936 = vmatpush1.msra.mxu0 0.0
        %937 = vmatprep.subr.mxu0 0.0
        %938 = vmatpush1.msra.mxu0 0.0
        %939 = vmatprep.subr.mxu0 0.0
        %940 = vmatpush1.msra.mxu0 0.0
        %941 = vmatprep.subr.mxu0 0.0
        %942 = vmatpush1.msra.mxu0 0.0
        %943 = vmatprep.subr.mxu0 0.0
        %944 = vmatpush1.msra.mxu0 0.0
        %945 = vmatprep.subr.mxu0 0.0
        %946 = vmatpush1.msra.mxu0 0.0
        %947 = vmatprep.subr.mxu0 0.0
        %948 = vmatpush1.msra.mxu0 0.0
        %949 = vmatprep.subr.mxu0 0.0
        %950 = vmatpush1.msra.mxu0 0.0
        %951 = vmatprep.subr.mxu0 0.0
        %952 = vmatpush1.msra.mxu0 0.0
        %953 = vmatprep.subr.mxu0 %v918
        %954 = vmatpush1.msra.mxu0 %v917
        %955 = vmatprep.subr.mxu0 0.0
        %956 = vmatpush2.msra.mxu0 0.0
        %957 = vmatprep.subr.mxu0 0.0
        %958 = vmatpush2.msra.mxu0 0.0
        %959 = vmatprep.subr.mxu0 0.0
        %960 = vmatpush2.msra.mxu0 0.0
        %961 = vmatprep.subr.mxu0 0.0
        %962 = vmatpush2.msra.mxu0 0.0
        %963 = vmatprep.subr.mxu0 0.0
        %964 = vmatpush2.msra.mxu0 0.0
        %965 = vmatprep.subr.mxu0 0.0
        %966 = vmatpush2.msra.mxu0 0.0
        %967 = vmatprep.subr.mxu0 0.0
        %968 = vmatpush2.msra.mxu0 0.0
        %969 = vmatprep.subr.mxu0 0.0
        %970 = vmatpush2.msra.mxu0 0.0
        %971 = vmatprep.subr.mxu0 0.0
        %972 = vmatpush2.msra.mxu0 0.0
        %973 = vmatprep.subr.mxu0 0.0
        %974 = vmatpush2.msra.mxu0 0.0
        %975 = vmatprep.subr.mxu0 0.0
        %976 = vmatpush2.msra.mxu0 0.0
        %977 = vmatprep.subr.mxu0 0.0
        %978 = vmatpush2.msra.mxu0 0.0
        %979 = vmatprep.subr.mxu0 0.0
        %980 = vmatpush2.msra.mxu0 0.0
        %981 = vmatprep.subr.mxu0 0.0
        %982 = vmatpush2.msra.mxu0 0.0
        %983 = vmatprep.subr.mxu0 0.0
        %984 = vmatpush2.msra.mxu0 0.0
        %985 = vmatprep.subr.mxu0 0.0
        %986 = vmatpush2.msra.mxu0 0.0
        %987 = vmatprep.mubr.f32.mxu0 0.0
        %988 = vmatmul.mubr.f32.gmra.mxu0 %v921
        %v989 = vpop.f32.mrf.mxu0
        %v990 = vadd.f32 0.0, %v989
        %v991 = vpop.f32.mrf.mxu0
        %v992 = vadd.f32 0.0, %v991
        %993 = vdwg.mxu0
        %v996 = vrot.slane %v990, 4
        %v997 = vrot.slane %v992, 4
        %1000 = vst [vmem:[#allocation2 + $0x20] sm:$0xf0] %v996
        %1001 = vst [vmem:[#allocation2 + $0x28] sm:$0xf0] %v997
        %v1002 = vld [vmem:[%s5] sm:$0xff]
        %v1003 = vld [vmem:[%s5 + $0x8] sm:$0xff]
        %1004 = vrot.lane.b32.xlu0 %v507, 80
        %v1005 = vpop.permute.xlu0 %1004
        %v1006 = vsel %vm512, %v1005, 0
        %1008 = vmatprep.subr.mxu0 0.0
        %1009 = vmatpush1.msra.mxu0 0.0
        %1010 = vmatprep.subr.mxu0 0.0
        %1011 = vmatpush1.msra.mxu0 0.0
        %1012 = vmatprep.subr.mxu0 0.0
        %1013 = vmatpush1.msra.mxu0 0.0
        %1014 = vmatprep.subr.mxu0 0.0
        %1015 = vmatpush1.msra.mxu0 0.0
        %1016 = vmatprep.subr.mxu0 0.0
        %1017 = vmatpush1.msra.mxu0 0.0
        %1018 = vmatprep.subr.mxu0 0.0
        %1019 = vmatpush1.msra.mxu0 0.0
        %1020 = vmatprep.subr.mxu0 0.0
        %1021 = vmatpush1.msra.mxu0 0.0
        %1022 = vmatprep.subr.mxu0 0.0
        %1023 = vmatpush1.msra.mxu0 0.0
        %1024 = vmatprep.subr.mxu0 0.0
        %1025 = vmatpush1.msra.mxu0 0.0
        %1026 = vmatprep.subr.mxu0 0.0
        %1027 = vmatpush1.msra.mxu0 0.0
        %1028 = vmatprep.subr.mxu0 0.0
        %1029 = vmatpush1.msra.mxu0 0.0
        %1030 = vmatprep.subr.mxu0 0.0
        %1031 = vmatpush1.msra.mxu0 0.0
        %1032 = vmatprep.subr.mxu0 0.0
        %1033 = vmatpush1.msra.mxu0 0.0
        %1034 = vmatprep.subr.mxu0 0.0
        %1035 = vmatpush1.msra.mxu0 0.0
        %1036 = vmatprep.subr.mxu0 0.0
        %1037 = vmatpush1.msra.mxu0 0.0
        %1038 = vmatprep.subr.mxu0 %v1003
        %1039 = vmatpush1.msra.mxu0 %v1002
        %1040 = vmatprep.subr.mxu0 0.0
        %1041 = vmatpush2.msra.mxu0 0.0
        %1042 = vmatprep.subr.mxu0 0.0
        %1043 = vmatpush2.msra.mxu0 0.0
        %1044 = vmatprep.subr.mxu0 0.0
        %1045 = vmatpush2.msra.mxu0 0.0
        %1046 = vmatprep.subr.mxu0 0.0
        %1047 = vmatpush2.msra.mxu0 0.0
        %1048 = vmatprep.subr.mxu0 0.0
        %1049 = vmatpush2.msra.mxu0 0.0
        %1050 = vmatprep.subr.mxu0 0.0
        %1051 = vmatpush2.msra.mxu0 0.0
        %1052 = vmatprep.subr.mxu0 0.0
        %1053 = vmatpush2.msra.mxu0 0.0
        %1054 = vmatprep.subr.mxu0 0.0
        %1055 = vmatpush2.msra.mxu0 0.0
        %1056 = vmatprep.subr.mxu0 0.0
        %1057 = vmatpush2.msra.mxu0 0.0
        %1058 = vmatprep.subr.mxu0 0.0
        %1059 = vmatpush2.msra.mxu0 0.0
        %1060 = vmatprep.subr.mxu0 0.0
        %1061 = vmatpush2.msra.mxu0 0.0
        %1062 = vmatprep.subr.mxu0 0.0
        %1063 = vmatpush2.msra.mxu0 0.0
        %1064 = vmatprep.subr.mxu0 0.0
        %1065 = vmatpush2.msra.mxu0 0.0
        %1066 = vmatprep.subr.mxu0 0.0
        %1067 = vmatpush2.msra.mxu0 0.0
        %1068 = vmatprep.subr.mxu0 0.0
        %1069 = vmatpush2.msra.mxu0 0.0
        %1070 = vmatprep.subr.mxu0 0.0
        %1071 = vmatpush2.msra.mxu0 0.0
        %1072 = vmatprep.mubr.f32.mxu0 0.0
        %1073 = vmatmul.mubr.f32.gmra.mxu0 %v1006
        %v1074 = vpop.f32.mrf.mxu0
        %v1075 = vadd.f32 0.0, %v1074
        %v1076 = vpop.f32.mrf.mxu0
        %v1077 = vadd.f32 0.0, %v1076
        %1078 = vdwg.mxu0
        %1079 = vst [vmem:[#allocation2 + $0x30] sm:$0xf] %v1075
        %1080 = vst [vmem:[#allocation2 + $0x38] sm:$0xf] %v1077
        %v1081 = vld [vmem:[%s5] sm:$0xff]
        %v1082 = vld [vmem:[%s5 + $0x8] sm:$0xff]
        %1083 = vrot.lane.b32.xlu0 %v507, 72
        %v1084 = vpop.permute.xlu0 %1083
        %v1085 = vsel %vm512, %v1084, 0
        %1087 = vmatprep.subr.mxu0 0.0
        %1088 = vmatpush1.msra.mxu0 0.0
        %1089 = vmatprep.subr.mxu0 0.0
        %1090 = vmatpush1.msra.mxu0 0.0
        %1091 = vmatprep.subr.mxu0 0.0
        %1092 = vmatpush1.msra.mxu0 0.0
        %1093 = vmatprep.subr.mxu0 0.0
        %1094 = vmatpush1.msra.mxu0 0.0
        %1095 = vmatprep.subr.mxu0 0.0
        %1096 = vmatpush1.msra.mxu0 0.0
        %1097 = vmatprep.subr.mxu0 0.0
        %1098 = vmatpush1.msra.mxu0 0.0
        %1099 = vmatprep.subr.mxu0 0.0
        %1100 = vmatpush1.msra.mxu0 0.0
        %1101 = vmatprep.subr.mxu0 0.0
        %1102 = vmatpush1.msra.mxu0 0.0
        %1103 = vmatprep.subr.mxu0 0.0
        %1104 = vmatpush1.msra.mxu0 0.0
        %1105 = vmatprep.subr.mxu0 0.0
        %1106 = vmatpush1.msra.mxu0 0.0
        %1107 = vmatprep.subr.mxu0 0.0
        %1108 = vmatpush1.msra.mxu0 0.0
        %1109 = vmatprep.subr.mxu0 0.0
        %1110 = vmatpush1.msra.mxu0 0.0
        %1111 = vmatprep.subr.mxu0 0.0
        %1112 = vmatpush1.msra.mxu0 0.0
        %1113 = vmatprep.subr.mxu0 0.0
        %1114 = vmatpush1.msra.mxu0 0.0
        %1115 = vmatprep.subr.mxu0 0.0
        %1116 = vmatpush1.msra.mxu0 0.0
        %1117 = vmatprep.subr.mxu0 %v1082
        %1118 = vmatpush1.msra.mxu0 %v1081
        %1119 = vmatprep.subr.mxu0 0.0
        %1120 = vmatpush2.msra.mxu0 0.0
        %1121 = vmatprep.subr.mxu0 0.0
        %1122 = vmatpush2.msra.mxu0 0.0
        %1123 = vmatprep.subr.mxu0 0.0
        %1124 = vmatpush2.msra.mxu0 0.0
        %1125 = vmatprep.subr.mxu0 0.0
        %1126 = vmatpush2.msra.mxu0 0.0
        %1127 = vmatprep.subr.mxu0 0.0
        %1128 = vmatpush2.msra.mxu0 0.0
        %1129 = vmatprep.subr.mxu0 0.0
        %1130 = vmatpush2.msra.mxu0 0.0
        %1131 = vmatprep.subr.mxu0 0.0
        %1132 = vmatpush2.msra.mxu0 0.0
        %1133 = vmatprep.subr.mxu0 0.0
        %1134 = vmatpush2.msra.mxu0 0.0
        %1135 = vmatprep.subr.mxu0 0.0
        %1136 = vmatpush2.msra.mxu0 0.0
        %1137 = vmatprep.subr.mxu0 0.0
        %1138 = vmatpush2.msra.mxu0 0.0
        %1139 = vmatprep.subr.mxu0 0.0
        %1140 = vmatpush2.msra.mxu0 0.0
        %1141 = vmatprep.subr.mxu0 0.0
        %1142 = vmatpush2.msra.mxu0 0.0
        %1143 = vmatprep.subr.mxu0 0.0
        %1144 = vmatpush2.msra.mxu0 0.0
        %1145 = vmatprep.subr.mxu0 0.0
        %1146 = vmatpush2.msra.mxu0 0.0
        %1147 = vmatprep.subr.mxu0 0.0
        %1148 = vmatpush2.msra.mxu0 0.0
        %1149 = vmatprep.subr.mxu0 0.0
        %1150 = vmatpush2.msra.mxu0 0.0
        %1151 = vmatprep.mubr.f32.mxu0 0.0
        %1152 = vmatmul.mubr.f32.gmra.mxu0 %v1085
        %v1153 = vpop.f32.mrf.mxu0
        %v1154 = vadd.f32 0.0, %v1153
        %v1155 = vpop.f32.mrf.mxu0
        %v1156 = vadd.f32 0.0, %v1155
        %1157 = vdwg.mxu0
        %v1160 = vrot.slane %v1154, 4
        %v1161 = vrot.slane %v1156, 4
        %1164 = vst [vmem:[#allocation2 + $0x30] sm:$0xf0] %v1160
        %1165 = vst [vmem:[#allocation2 + $0x38] sm:$0xf0] %v1161
        %v1166 = vld [vmem:[%s6] sm:$0xff]
        %v1167 = vld [vmem:[%s6 + $0x8] sm:$0xff]
        %v1168 = vld [vmem:[%s6 + $0x10] sm:$0xff]
        %v1169 = vld [vmem:[%s6 + $0x18] sm:$0xff]
        %v1170 = vld [vmem:[%s6 + $0x20] sm:$0xff]
        %v1171 = vld [vmem:[%s6 + $0x28] sm:$0xff]
        %v1172 = vld [vmem:[%s6 + $0x30] sm:$0xff]
        %v1173 = vld [vmem:[%s6 + $0x38] sm:$0xff]
        %v1174 = vld [vmem:[%s6 + $0x40] sm:$0xff]
        %v1175 = vld [vmem:[%s6 + $0x48] sm:$0xff]
        %v1176 = vld [vmem:[%s6 + $0x50] sm:$0xff]
        %v1177 = vld [vmem:[%s6 + $0x58] sm:$0xff]
        %v1178 = vld [vmem:[%s6 + $0x60] sm:$0xff]
        %v1179 = vld [vmem:[%s6 + $0x68] sm:$0xff]
        %v1180 = vld [vmem:[%s6 + $0x70] sm:$0xff]
        %v1181 = vld [vmem:[%s6 + $0x78] sm:$0xff]
        %v1182 = vld [vmem:[%s6 + $0x80] sm:$0xff]
        %v1183 = vld [vmem:[%s6 + $0x88] sm:$0xff]
        %v1184 = vld [vmem:[%s6 + $0x90] sm:$0xff]
        %v1185 = vld [vmem:[%s6 + $0x98] sm:$0xff]
        %v1186 = vld [vmem:[%s6 + $0xa0] sm:$0xff]
        %v1187 = vld [vmem:[%s6 + $0xa8] sm:$0xff]
        %v1188 = vld [vmem:[%s6 + $0xb0] sm:$0xff]
        %v1189 = vld [vmem:[%s6 + $0xb8] sm:$0xff]
        %v1190 = vld [vmem:[%s6 + $0xc0] sm:$0xff]
        %v1191 = vld [vmem:[%s6 + $0xc8] sm:$0xff]
        %v1192 = vld [vmem:[%s6 + $0xd0] sm:$0xff]
        %v1193 = vld [vmem:[%s6 + $0xd8] sm:$0xff]
        %v1194 = vld [vmem:[%s6 + $0xe0] sm:$0xff]
        %v1195 = vld [vmem:[%s6 + $0xe8] sm:$0xff]
        %v1196 = vld [vmem:[%s6 + $0xf0] sm:$0xff]
        %v1197 = vld [vmem:[%s6 + $0xf8] sm:$0xff]
        %v1198 = vld [vmem:[%s6 + $0x100] sm:$0xff]
        %v1199 = vld [vmem:[%s6 + $0x108] sm:$0xff]
        %v1200 = vld [vmem:[%s6 + $0x110] sm:$0xff]
        %v1201 = vld [vmem:[%s6 + $0x118] sm:$0xff]
        %v1202 = vld [vmem:[%s6 + $0x120] sm:$0xff]
        %v1203 = vld [vmem:[%s6 + $0x128] sm:$0xff]
        %v1204 = vld [vmem:[%s6 + $0x130] sm:$0xff]
        %v1205 = vld [vmem:[%s6 + $0x138] sm:$0xff]
        %v1206 = vld [vmem:[%s6 + $0x140] sm:$0xff]
        %v1207 = vld [vmem:[%s6 + $0x148] sm:$0xff]
        %v1208 = vld [vmem:[%s6 + $0x150] sm:$0xff]
        %v1209 = vld [vmem:[%s6 + $0x158] sm:$0xff]
        %v1210 = vld [vmem:[%s6 + $0x160] sm:$0xff]
        %v1211 = vld [vmem:[%s6 + $0x168] sm:$0xff]
        %v1212 = vld [vmem:[%s6 + $0x170] sm:$0xff]
        %v1213 = vld [vmem:[%s6 + $0x178] sm:$0xff]
        %v1214 = vld [vmem:[%s6 + $0x180] sm:$0xff]
        %v1215 = vld [vmem:[%s6 + $0x188] sm:$0xff]
        %v1216 = vld [vmem:[%s6 + $0x190] sm:$0xff]
        %v1217 = vld [vmem:[%s6 + $0x198] sm:$0xff]
        %v1218 = vld [vmem:[%s6 + $0x1a0] sm:$0xff]
        %v1219 = vld [vmem:[%s6 + $0x1a8] sm:$0xff]
        %v1220 = vld [vmem:[%s6 + $0x1b0] sm:$0xff]
        %v1221 = vld [vmem:[%s6 + $0x1b8] sm:$0xff]
        %v1222 = vld [vmem:[%s6 + $0x1c0] sm:$0xff]
        %v1223 = vld [vmem:[%s6 + $0x1c8] sm:$0xff]
        %v1224 = vld [vmem:[%s6 + $0x1d0] sm:$0xff]
        %v1225 = vld [vmem:[%s6 + $0x1d8] sm:$0xff]
        %v1226 = vld [vmem:[%s6 + $0x1e0] sm:$0xff]
        %v1227 = vld [vmem:[%s6 + $0x1e8] sm:$0xff]
        %v1228 = vld [vmem:[%s6 + $0x1f0] sm:$0xff]
        %v1229 = vld [vmem:[%s6 + $0x1f8] sm:$0xff]
        %v1230 = vld [vmem:[%s6 + $0x200] sm:$0xff]
        %v1231 = vld [vmem:[%s6 + $0x208] sm:$0xff]
        %v1232 = vld [vmem:[%s6 + $0x210] sm:$0xff]
        %v1233 = vld [vmem:[%s6 + $0x218] sm:$0xff]
        %v1234 = vld [vmem:[%s6 + $0x220] sm:$0xff]
        %v1235 = vld [vmem:[%s6 + $0x228] sm:$0xff]
        %v1236 = vld [vmem:[%s6 + $0x230] sm:$0xff]
        %v1237 = vld [vmem:[%s6 + $0x238] sm:$0xff]
        %v1238 = vld [vmem:[%s6 + $0x240] sm:$0xff]
        %v1239 = vld [vmem:[%s6 + $0x248] sm:$0xff]
        %v1240 = vld [vmem:[%s6 + $0x250] sm:$0xff]
        %v1241 = vld [vmem:[%s6 + $0x258] sm:$0xff]
        %v1242 = vld [vmem:[%s6 + $0x260] sm:$0xff]
        %v1243 = vld [vmem:[%s6 + $0x268] sm:$0xff]
        %v1244 = vld [vmem:[%s6 + $0x270] sm:$0xff]
        %v1245 = vld [vmem:[%s6 + $0x278] sm:$0xff]
        %v1246 = vld [vmem:[%s6 + $0x280] sm:$0xff]
        %v1247 = vld [vmem:[%s6 + $0x288] sm:$0xff]
        %v1248 = vld [vmem:[%s6 + $0x290] sm:$0xff]
        %v1249 = vld [vmem:[%s6 + $0x298] sm:$0xff]
        %v1250 = vld [vmem:[%s6 + $0x2a0] sm:$0xff]
        %v1251 = vld [vmem:[%s6 + $0x2a8] sm:$0xff]
        %v1252 = vld [vmem:[%s6 + $0x2b0] sm:$0xff]
        %v1253 = vld [vmem:[%s6 + $0x2b8] sm:$0xff]
        %v1254 = vld [vmem:[%s6 + $0x2c0] sm:$0xff]
        %v1255 = vld [vmem:[%s6 + $0x2c8] sm:$0xff]
        %v1256 = vld [vmem:[%s6 + $0x2d0] sm:$0xff]
        %v1257 = vld [vmem:[%s6 + $0x2d8] sm:$0xff]
        %v1258 = vld [vmem:[%s6 + $0x2e0] sm:$0xff]
        %v1259 = vld [vmem:[%s6 + $0x2e8] sm:$0xff]
        %v1260 = vld [vmem:[%s6 + $0x2f0] sm:$0xff]
        %v1261 = vld [vmem:[%s6 + $0x2f8] sm:$0xff]
        %v1262 = vld [vmem:[%s6 + $0x300] sm:$0xff]
        %v1263 = vld [vmem:[%s6 + $0x308] sm:$0xff]
        %v1264 = vld [vmem:[%s6 + $0x310] sm:$0xff]
        %v1265 = vld [vmem:[%s6 + $0x318] sm:$0xff]
        %v1266 = vld [vmem:[%s6 + $0x320] sm:$0xff]
        %v1267 = vld [vmem:[%s6 + $0x328] sm:$0xff]
        %v1268 = vld [vmem:[%s6 + $0x330] sm:$0xff]
        %v1269 = vld [vmem:[%s6 + $0x338] sm:$0xff]
        %v1270 = vld [vmem:[%s6 + $0x340] sm:$0xff]
        %v1271 = vld [vmem:[%s6 + $0x348] sm:$0xff]
        %v1272 = vld [vmem:[%s6 + $0x350] sm:$0xff]
        %v1273 = vld [vmem:[%s6 + $0x358] sm:$0xff]
        %v1274 = vld [vmem:[%s6 + $0x360] sm:$0xff]
        %v1275 = vld [vmem:[%s6 + $0x368] sm:$0xff]
        %v1276 = vld [vmem:[%s6 + $0x370] sm:$0xff]
        %v1277 = vld [vmem:[%s6 + $0x378] sm:$0xff]
        %v1278 = vld [vmem:[%s6 + $0x380] sm:$0xff]
        %v1279 = vld [vmem:[%s6 + $0x388] sm:$0xff]
        %v1280 = vld [vmem:[%s6 + $0x390] sm:$0xff]
        %v1281 = vld [vmem:[%s6 + $0x398] sm:$0xff]
        %v1282 = vld [vmem:[%s6 + $0x3a0] sm:$0xff]
        %v1283 = vld [vmem:[%s6 + $0x3a8] sm:$0xff]
        %v1284 = vld [vmem:[%s6 + $0x3b0] sm:$0xff]
        %v1285 = vld [vmem:[%s6 + $0x3b8] sm:$0xff]
        %v1286 = vld [vmem:[%s6 + $0x3c0] sm:$0xff]
        %v1287 = vld [vmem:[%s6 + $0x3c8] sm:$0xff]
        %v1288 = vld [vmem:[%s6 + $0x3d0] sm:$0xff]
        %v1289 = vld [vmem:[%s6 + $0x3d8] sm:$0xff]
        %v1290 = vld [vmem:[%s6 + $0x3e0] sm:$0xff]
        %v1291 = vld [vmem:[%s6 + $0x3e8] sm:$0xff]
        %v1292 = vld [vmem:[%s6 + $0x3f0] sm:$0xff]
        %v1293 = vld [vmem:[%s6 + $0x3f8] sm:$0xff]
        %v1294 = vld [vmem:[#allocation2] sm:$0xff]
        %v1295 = vld [vmem:[#allocation2 + $0x8] sm:$0xff]
        %v1296 = vld [vmem:[#allocation2 + $0x10] sm:$0xff]
        %v1297 = vld [vmem:[#allocation2 + $0x18] sm:$0xff]
        %v1298 = vld [vmem:[#allocation2 + $0x20] sm:$0xff]
        %v1299 = vld [vmem:[#allocation2 + $0x28] sm:$0xff]
        %v1300 = vld [vmem:[#allocation2 + $0x30] sm:$0xff]
        %v1301 = vld [vmem:[#allocation2 + $0x38] sm:$0xff]
        %v1303 = vsel %vm436, %v1166, 0
        %v1306 = vsel %vm436, %v1167, 0
        %v1309 = vsel %vm436, %v1168, 0
        %v1312 = vsel %vm436, %v1169, 0
        %v1315 = vsel %vm436, %v1170, 0
        %v1318 = vsel %vm436, %v1171, 0
        %v1321 = vsel %vm436, %v1172, 0
        %v1324 = vsel %vm436, %v1173, 0
        %v1327 = vsel %vm436, %v1174, 0
        %v1330 = vsel %vm436, %v1175, 0
        %v1333 = vsel %vm436, %v1176, 0
        %v1336 = vsel %vm436, %v1177, 0
        %v1339 = vsel %vm436, %v1178, 0
        %v1342 = vsel %vm436, %v1179, 0
        %v1345 = vsel %vm436, %v1180, 0
        %v1348 = vsel %vm436, %v1181, 0
        %v1351 = vsel %vm436, %v1182, 0
        %v1354 = vsel %vm436, %v1183, 0
        %v1357 = vsel %vm436, %v1184, 0
        %v1360 = vsel %vm436, %v1185, 0
        %v1363 = vsel %vm436, %v1186, 0
        %v1366 = vsel %vm436, %v1187, 0
        %v1369 = vsel %vm436, %v1188, 0
        %v1372 = vsel %vm436, %v1189, 0
        %v1375 = vsel %vm436, %v1190, 0
        %v1378 = vsel %vm436, %v1191, 0
        %v1381 = vsel %vm436, %v1192, 0
        %v1384 = vsel %vm436, %v1193, 0
        %v1387 = vsel %vm436, %v1194, 0
        %v1390 = vsel %vm436, %v1195, 0
        %v1393 = vsel %vm436, %v1196, 0
        %v1396 = vsel %vm436, %v1197, 0
        %v1399 = vsel %vm436, %v1198, 0
        %v1402 = vsel %vm436, %v1199, 0
        %v1405 = vsel %vm436, %v1200, 0
        %v1408 = vsel %vm436, %v1201, 0
        %v1411 = vsel %vm436, %v1202, 0
        %v1414 = vsel %vm436, %v1203, 0
        %v1417 = vsel %vm436, %v1204, 0
        %v1420 = vsel %vm436, %v1205, 0
        %v1423 = vsel %vm436, %v1206, 0
        %v1426 = vsel %vm436, %v1207, 0
        %v1429 = vsel %vm436, %v1208, 0
        %v1432 = vsel %vm436, %v1209, 0
        %v1435 = vsel %vm436, %v1210, 0
        %v1438 = vsel %vm436, %v1211, 0
        %v1441 = vsel %vm436, %v1212, 0
        %v1444 = vsel %vm436, %v1213, 0
        %v1447 = vsel %vm436, %v1214, 0
        %v1450 = vsel %vm436, %v1215, 0
        %v1453 = vsel %vm436, %v1216, 0
        %v1456 = vsel %vm436, %v1217, 0
        %v1459 = vsel %vm436, %v1218, 0
        %v1462 = vsel %vm436, %v1219, 0
        %v1465 = vsel %vm436, %v1220, 0
        %v1468 = vsel %vm436, %v1221, 0
        %v1471 = vsel %vm436, %v1222, 0
        %v1474 = vsel %vm436, %v1223, 0
        %v1477 = vsel %vm436, %v1224, 0
        %v1480 = vsel %vm436, %v1225, 0
        %v1483 = vsel %vm436, %v1226, 0
        %v1486 = vsel %vm436, %v1227, 0
        %v1489 = vsel %vm436, %v1228, 0
        %v1492 = vsel %vm436, %v1229, 0
        %v1495 = vsel %vm436, %v1230, 0
        %v1498 = vsel %vm436, %v1231, 0
        %v1501 = vsel %vm436, %v1232, 0
        %v1504 = vsel %vm436, %v1233, 0
        %v1507 = vsel %vm436, %v1234, 0
        %v1510 = vsel %vm436, %v1235, 0
        %v1513 = vsel %vm436, %v1236, 0
        %v1516 = vsel %vm436, %v1237, 0
        %v1519 = vsel %vm436, %v1238, 0
        %v1522 = vsel %vm436, %v1239, 0
        %v1525 = vsel %vm436, %v1240, 0
        %v1528 = vsel %vm436, %v1241, 0
        %v1531 = vsel %vm436, %v1242, 0
        %v1534 = vsel %vm436, %v1243, 0
        %v1537 = vsel %vm436, %v1244, 0
        %v1540 = vsel %vm436, %v1245, 0
        %v1543 = vsel %vm436, %v1246, 0
        %v1546 = vsel %vm436, %v1247, 0
        %v1549 = vsel %vm436, %v1248, 0
        %v1552 = vsel %vm436, %v1249, 0
        %v1555 = vsel %vm436, %v1250, 0
        %v1558 = vsel %vm436, %v1251, 0
        %v1561 = vsel %vm436, %v1252, 0
        %v1564 = vsel %vm436, %v1253, 0
        %v1567 = vsel %vm436, %v1254, 0
        %v1570 = vsel %vm436, %v1255, 0
        %v1573 = vsel %vm436, %v1256, 0
        %v1576 = vsel %vm436, %v1257, 0
        %v1579 = vsel %vm436, %v1258, 0
        %v1582 = vsel %vm436, %v1259, 0
        %v1585 = vsel %vm436, %v1260, 0
        %v1588 = vsel %vm436, %v1261, 0
        %v1591 = vsel %vm436, %v1262, 0
        %v1594 = vsel %vm436, %v1263, 0
        %v1597 = vsel %vm436, %v1264, 0
        %v1600 = vsel %vm436, %v1265, 0
        %v1603 = vsel %vm436, %v1266, 0
        %v1606 = vsel %vm436, %v1267, 0
        %v1609 = vsel %vm436, %v1268, 0
        %v1612 = vsel %vm436, %v1269, 0
        %v1615 = vsel %vm436, %v1270, 0
        %v1618 = vsel %vm436, %v1271, 0
        %v1621 = vsel %vm436, %v1272, 0
        %v1624 = vsel %vm436, %v1273, 0
        %v1627 = vsel %vm436, %v1274, 0
        %v1630 = vsel %vm436, %v1275, 0
        %v1633 = vsel %vm436, %v1276, 0
        %v1636 = vsel %vm436, %v1277, 0
        %v1639 = vsel %vm436, %v1278, 0
        %v1642 = vsel %vm436, %v1279, 0
        %v1645 = vsel %vm436, %v1280, 0
        %v1648 = vsel %vm436, %v1281, 0
        %v1651 = vsel %vm436, %v1282, 0
        %v1654 = vsel %vm436, %v1283, 0
        %v1657 = vsel %vm436, %v1284, 0
        %v1660 = vsel %vm436, %v1285, 0
        %v1663 = vsel %vm436, %v1286, 0
        %v1666 = vsel %vm436, %v1287, 0
        %v1669 = vsel %vm436, %v1288, 0
        %v1672 = vsel %vm436, %v1289, 0
        %v1675 = vsel %vm436, %v1290, 0
        %v1678 = vsel %vm436, %v1291, 0
        %v1681 = vsel %vm436, %v1292, 0
        %v1684 = vsel %vm436, %v1293, 0
        %1686 = vmatprep.subr.mxu0 0.0
        %1687 = vmatpush1.msra.mxu0 0.0
        %1688 = vmatprep.subr.mxu0 0.0
        %1689 = vmatpush1.msra.mxu0 0.0
        %1690 = vmatprep.subr.mxu0 0.0
        %1691 = vmatpush1.msra.mxu0 0.0
        %1692 = vmatprep.subr.mxu0 0.0
        %1693 = vmatpush1.msra.mxu0 0.0
        %1694 = vmatprep.subr.mxu0 0.0
        %1695 = vmatpush1.msra.mxu0 0.0
        %1696 = vmatprep.subr.mxu0 0.0
        %1697 = vmatpush1.msra.mxu0 0.0
        %1698 = vmatprep.subr.mxu0 0.0
        %1699 = vmatpush1.msra.mxu0 0.0
        %1700 = vmatprep.subr.mxu0 0.0
        %1701 = vmatpush1.msra.mxu0 0.0
        %1702 = vmatprep.subr.mxu0 0.0
        %1703 = vmatpush1.msra.mxu0 0.0
        %1704 = vmatprep.subr.mxu0 0.0
        %1705 = vmatpush1.msra.mxu0 0.0
        %1706 = vmatprep.subr.mxu0 0.0
        %1707 = vmatpush1.msra.mxu0 0.0
        %1708 = vmatprep.subr.mxu0 0.0
        %1709 = vmatpush1.msra.mxu0 0.0
        %1710 = vmatprep.subr.mxu0 %v1301
        %1711 = vmatpush1.msra.mxu0 %v1300
        %1712 = vmatprep.subr.mxu0 %v1299
        %1713 = vmatpush1.msra.mxu0 %v1298
        %1714 = vmatprep.subr.mxu0 %v1297
        %1715 = vmatpush1.msra.mxu0 %v1296
        %1716 = vmatprep.subr.mxu0 %v1295
        %1717 = vmatpush1.msra.mxu0 %v1294
        %1718 = vmatprep.subr.mxu0 0.0
        %1719 = vmatpush2.msra.mxu0 0.0
        %1720 = vmatprep.subr.mxu0 0.0
        %1721 = vmatpush2.msra.mxu0 0.0
        %1722 = vmatprep.subr.mxu0 0.0
        %1723 = vmatpush2.msra.mxu0 0.0
        %1724 = vmatprep.subr.mxu0 0.0
        %1725 = vmatpush2.msra.mxu0 0.0
        %1726 = vmatprep.subr.mxu0 0.0
        %1727 = vmatpush2.msra.mxu0 0.0
        %1728 = vmatprep.subr.mxu0 0.0
        %1729 = vmatpush2.msra.mxu0 0.0
        %1730 = vmatprep.subr.mxu0 0.0
        %1731 = vmatpush2.msra.mxu0 0.0
        %1732 = vmatprep.subr.mxu0 0.0
        %1733 = vmatpush2.msra.mxu0 0.0
        %1734 = vmatprep.subr.mxu0 0.0
        %1735 = vmatpush2.msra.mxu0 0.0
        %1736 = vmatprep.subr.mxu0 0.0
        %1737 = vmatpush2.msra.mxu0 0.0
        %1738 = vmatprep.subr.mxu0 0.0
        %1739 = vmatpush2.msra.mxu0 0.0
        %1740 = vmatprep.subr.mxu0 0.0
        %1741 = vmatpush2.msra.mxu0 0.0
        %1742 = vmatprep.subr.mxu0 0.0
        %1743 = vmatpush2.msra.mxu0 0.0
        %1744 = vmatprep.subr.mxu0 0.0
        %1745 = vmatpush2.msra.mxu0 0.0
        %1746 = vmatprep.subr.mxu0 0.0
        %1747 = vmatpush2.msra.mxu0 0.0
        %1748 = vmatprep.subr.mxu0 0.0
        %1749 = vmatpush2.msra.mxu0 0.0
        %1750 = vmatprep.mubr.f32.mxu0 0.0
        %1751 = vmatmul.mubr.f32.gmra.mxu0 %v1303
        %v1752 = vpop.f32.mrf.mxu0
        %v1753 = vadd.f32 0.0, %v1752
        %v1754 = vpop.f32.mrf.mxu0
        %v1755 = vadd.f32 0.0, %v1754
        %1756 = vmatprep.mubr.f32.mxu0 0.0
        %1757 = vmatmul.mubr.f32.gmra.mxu0 %v1306
        %v1758 = vpop.f32.mrf.mxu0
        %v1759 = vadd.f32 0.0, %v1758
        %v1760 = vpop.f32.mrf.mxu0
        %v1761 = vadd.f32 0.0, %v1760
        %1762 = vmatprep.mubr.f32.mxu0 0.0
        %1763 = vmatmul.mubr.f32.gmra.mxu0 %v1309
        %v1764 = vpop.f32.mrf.mxu0
        %v1765 = vadd.f32 0.0, %v1764
        %v1766 = vpop.f32.mrf.mxu0
        %v1767 = vadd.f32 0.0, %v1766
        %1768 = vmatprep.mubr.f32.mxu0 0.0
        %1769 = vmatmul.mubr.f32.gmra.mxu0 %v1312
        %v1770 = vpop.f32.mrf.mxu0
        %v1771 = vadd.f32 0.0, %v1770
        %v1772 = vpop.f32.mrf.mxu0
        %v1773 = vadd.f32 0.0, %v1772
        %1774 = vmatprep.mubr.f32.mxu0 0.0
        %1775 = vmatmul.mubr.f32.gmra.mxu0 %v1315
        %v1776 = vpop.f32.mrf.mxu0
        %v1777 = vadd.f32 0.0, %v1776
        %v1778 = vpop.f32.mrf.mxu0
        %v1779 = vadd.f32 0.0, %v1778
        %1780 = vmatprep.mubr.f32.mxu0 0.0
        %1781 = vmatmul.mubr.f32.gmra.mxu0 %v1318
        %v1782 = vpop.f32.mrf.mxu0
        %v1783 = vadd.f32 0.0, %v1782
        %v1784 = vpop.f32.mrf.mxu0
        %v1785 = vadd.f32 0.0, %v1784
        %1786 = vmatprep.mubr.f32.mxu0 0.0
        %1787 = vmatmul.mubr.f32.gmra.mxu0 %v1321
        %v1788 = vpop.f32.mrf.mxu0
        %v1789 = vadd.f32 0.0, %v1788
        %v1790 = vpop.f32.mrf.mxu0
        %v1791 = vadd.f32 0.0, %v1790
        %1792 = vmatprep.mubr.f32.mxu0 0.0
        %1793 = vmatmul.mubr.f32.gmra.mxu0 %v1324
        %v1794 = vpop.f32.mrf.mxu0
        %v1795 = vadd.f32 0.0, %v1794
        %v1796 = vpop.f32.mrf.mxu0
        %v1797 = vadd.f32 0.0, %v1796
        %1798 = vmatprep.mubr.f32.mxu0 0.0
        %1799 = vmatmul.mubr.f32.gmra.mxu0 %v1327
        %v1800 = vpop.f32.mrf.mxu0
        %v1801 = vadd.f32 0.0, %v1800
        %v1802 = vpop.f32.mrf.mxu0
        %v1803 = vadd.f32 0.0, %v1802
        %1804 = vmatprep.mubr.f32.mxu0 0.0
        %1805 = vmatmul.mubr.f32.gmra.mxu0 %v1330
        %v1806 = vpop.f32.mrf.mxu0
        %v1807 = vadd.f32 0.0, %v1806
        %v1808 = vpop.f32.mrf.mxu0
        %v1809 = vadd.f32 0.0, %v1808
        %1810 = vmatprep.mubr.f32.mxu0 0.0
        %1811 = vmatmul.mubr.f32.gmra.mxu0 %v1333
        %v1812 = vpop.f32.mrf.mxu0
        %v1813 = vadd.f32 0.0, %v1812
        %v1814 = vpop.f32.mrf.mxu0
        %v1815 = vadd.f32 0.0, %v1814
        %1816 = vmatprep.mubr.f32.mxu0 0.0
        %1817 = vmatmul.mubr.f32.gmra.mxu0 %v1336
        %v1818 = vpop.f32.mrf.mxu0
        %v1819 = vadd.f32 0.0, %v1818
        %v1820 = vpop.f32.mrf.mxu0
        %v1821 = vadd.f32 0.0, %v1820
        %1822 = vmatprep.mubr.f32.mxu0 0.0
        %1823 = vmatmul.mubr.f32.gmra.mxu0 %v1339
        %v1824 = vpop.f32.mrf.mxu0
        %v1825 = vadd.f32 0.0, %v1824
        %v1826 = vpop.f32.mrf.mxu0
        %v1827 = vadd.f32 0.0, %v1826
        %1828 = vmatprep.mubr.f32.mxu0 0.0
        %1829 = vmatmul.mubr.f32.gmra.mxu0 %v1342
        %v1830 = vpop.f32.mrf.mxu0
        %v1831 = vadd.f32 0.0, %v1830
        %v1832 = vpop.f32.mrf.mxu0
        %v1833 = vadd.f32 0.0, %v1832
        %1834 = vmatprep.mubr.f32.mxu0 0.0
        %1835 = vmatmul.mubr.f32.gmra.mxu0 %v1345
        %v1836 = vpop.f32.mrf.mxu0
        %v1837 = vadd.f32 0.0, %v1836
        %v1838 = vpop.f32.mrf.mxu0
        %v1839 = vadd.f32 0.0, %v1838
        %1840 = vmatprep.mubr.f32.mxu0 0.0
        %1841 = vmatmul.mubr.f32.gmra.mxu0 %v1348
        %v1842 = vpop.f32.mrf.mxu0
        %v1843 = vadd.f32 0.0, %v1842
        %v1844 = vpop.f32.mrf.mxu0
        %v1845 = vadd.f32 0.0, %v1844
        %1846 = vmatprep.mubr.f32.mxu0 0.0
        %1847 = vmatmul.mubr.f32.gmra.mxu0 %v1351
        %v1848 = vpop.f32.mrf.mxu0
        %v1849 = vadd.f32 0.0, %v1848
        %v1850 = vpop.f32.mrf.mxu0
        %v1851 = vadd.f32 0.0, %v1850
        %1852 = vmatprep.mubr.f32.mxu0 0.0
        %1853 = vmatmul.mubr.f32.gmra.mxu0 %v1354
        %v1854 = vpop.f32.mrf.mxu0
        %v1855 = vadd.f32 0.0, %v1854
        %v1856 = vpop.f32.mrf.mxu0
        %v1857 = vadd.f32 0.0, %v1856
        %1858 = vmatprep.mubr.f32.mxu0 0.0
        %1859 = vmatmul.mubr.f32.gmra.mxu0 %v1357
        %v1860 = vpop.f32.mrf.mxu0
        %v1861 = vadd.f32 0.0, %v1860
        %v1862 = vpop.f32.mrf.mxu0
        %v1863 = vadd.f32 0.0, %v1862
        %1864 = vmatprep.mubr.f32.mxu0 0.0
        %1865 = vmatmul.mubr.f32.gmra.mxu0 %v1360
        %v1866 = vpop.f32.mrf.mxu0
        %v1867 = vadd.f32 0.0, %v1866
        %v1868 = vpop.f32.mrf.mxu0
        %v1869 = vadd.f32 0.0, %v1868
        %1870 = vmatprep.mubr.f32.mxu0 0.0
        %1871 = vmatmul.mubr.f32.gmra.mxu0 %v1363
        %v1872 = vpop.f32.mrf.mxu0
        %v1873 = vadd.f32 0.0, %v1872
        %v1874 = vpop.f32.mrf.mxu0
        %v1875 = vadd.f32 0.0, %v1874
        %1876 = vmatprep.mubr.f32.mxu0 0.0
        %1877 = vmatmul.mubr.f32.gmra.mxu0 %v1366
        %v1878 = vpop.f32.mrf.mxu0
        %v1879 = vadd.f32 0.0, %v1878
        %v1880 = vpop.f32.mrf.mxu0
        %v1881 = vadd.f32 0.0, %v1880
        %1882 = vmatprep.mubr.f32.mxu0 0.0
        %1883 = vmatmul.mubr.f32.gmra.mxu0 %v1369
        %v1884 = vpop.f32.mrf.mxu0
        %v1885 = vadd.f32 0.0, %v1884
        %v1886 = vpop.f32.mrf.mxu0
        %v1887 = vadd.f32 0.0, %v1886
        %1888 = vmatprep.mubr.f32.mxu0 0.0
        %1889 = vmatmul.mubr.f32.gmra.mxu0 %v1372
        %v1890 = vpop.f32.mrf.mxu0
        %v1891 = vadd.f32 0.0, %v1890
        %v1892 = vpop.f32.mrf.mxu0
        %v1893 = vadd.f32 0.0, %v1892
        %1894 = vmatprep.mubr.f32.mxu0 0.0
        %1895 = vmatmul.mubr.f32.gmra.mxu0 %v1375
        %v1896 = vpop.f32.mrf.mxu0
        %v1897 = vadd.f32 0.0, %v1896
        %v1898 = vpop.f32.mrf.mxu0
        %v1899 = vadd.f32 0.0, %v1898
        %1900 = vmatprep.mubr.f32.mxu0 0.0
        %1901 = vmatmul.mubr.f32.gmra.mxu0 %v1378
        %v1902 = vpop.f32.mrf.mxu0
        %v1903 = vadd.f32 0.0, %v1902
        %v1904 = vpop.f32.mrf.mxu0
        %v1905 = vadd.f32 0.0, %v1904
        %1906 = vmatprep.mubr.f32.mxu0 0.0
        %1907 = vmatmul.mubr.f32.gmra.mxu0 %v1381
        %v1908 = vpop.f32.mrf.mxu0
        %v1909 = vadd.f32 0.0, %v1908
        %v1910 = vpop.f32.mrf.mxu0
        %v1911 = vadd.f32 0.0, %v1910
        %1912 = vmatprep.mubr.f32.mxu0 0.0
        %1913 = vmatmul.mubr.f32.gmra.mxu0 %v1384
        %v1914 = vpop.f32.mrf.mxu0
        %v1915 = vadd.f32 0.0, %v1914
        %v1916 = vpop.f32.mrf.mxu0
        %v1917 = vadd.f32 0.0, %v1916
        %1918 = vmatprep.mubr.f32.mxu0 0.0
        %1919 = vmatmul.mubr.f32.gmra.mxu0 %v1387
        %v1920 = vpop.f32.mrf.mxu0
        %v1921 = vadd.f32 0.0, %v1920
        %v1922 = vpop.f32.mrf.mxu0
        %v1923 = vadd.f32 0.0, %v1922
        %1924 = vmatprep.mubr.f32.mxu0 0.0
        %1925 = vmatmul.mubr.f32.gmra.mxu0 %v1390
        %v1926 = vpop.f32.mrf.mxu0
        %v1927 = vadd.f32 0.0, %v1926
        %v1928 = vpop.f32.mrf.mxu0
        %v1929 = vadd.f32 0.0, %v1928
        %1930 = vmatprep.mubr.f32.mxu0 0.0
        %1931 = vmatmul.mubr.f32.gmra.mxu0 %v1393
        %v1932 = vpop.f32.mrf.mxu0
        %v1933 = vadd.f32 0.0, %v1932
        %v1934 = vpop.f32.mrf.mxu0
        %v1935 = vadd.f32 0.0, %v1934
        %1936 = vmatprep.mubr.f32.mxu0 0.0
        %1937 = vmatmul.mubr.f32.gmra.mxu0 %v1396
        %v1938 = vpop.f32.mrf.mxu0
        %v1939 = vadd.f32 0.0, %v1938
        %v1940 = vpop.f32.mrf.mxu0
        %v1941 = vadd.f32 0.0, %v1940
        %1942 = vmatprep.mubr.f32.mxu0 0.0
        %1943 = vmatmul.mubr.f32.gmra.mxu0 %v1399
        %v1944 = vpop.f32.mrf.mxu0
        %v1945 = vadd.f32 0.0, %v1944
        %v1946 = vpop.f32.mrf.mxu0
        %v1947 = vadd.f32 0.0, %v1946
        %1948 = vmatprep.mubr.f32.mxu0 0.0
        %1949 = vmatmul.mubr.f32.gmra.mxu0 %v1402
        %v1950 = vpop.f32.mrf.mxu0
        %v1951 = vadd.f32 0.0, %v1950
        %v1952 = vpop.f32.mrf.mxu0
        %v1953 = vadd.f32 0.0, %v1952
        %1954 = vmatprep.mubr.f32.mxu0 0.0
        %1955 = vmatmul.mubr.f32.gmra.mxu0 %v1405
        %v1956 = vpop.f32.mrf.mxu0
        %v1957 = vadd.f32 0.0, %v1956
        %v1958 = vpop.f32.mrf.mxu0
        %v1959 = vadd.f32 0.0, %v1958
        %1960 = vmatprep.mubr.f32.mxu0 0.0
        %1961 = vmatmul.mubr.f32.gmra.mxu0 %v1408
        %v1962 = vpop.f32.mrf.mxu0
        %v1963 = vadd.f32 0.0, %v1962
        %v1964 = vpop.f32.mrf.mxu0
        %v1965 = vadd.f32 0.0, %v1964
        %1966 = vmatprep.mubr.f32.mxu0 0.0
        %1967 = vmatmul.mubr.f32.gmra.mxu0 %v1411
        %v1968 = vpop.f32.mrf.mxu0
        %v1969 = vadd.f32 0.0, %v1968
        %v1970 = vpop.f32.mrf.mxu0
        %v1971 = vadd.f32 0.0, %v1970
        %1972 = vmatprep.mubr.f32.mxu0 0.0
        %1973 = vmatmul.mubr.f32.gmra.mxu0 %v1414
        %v1974 = vpop.f32.mrf.mxu0
        %v1975 = vadd.f32 0.0, %v1974
        %v1976 = vpop.f32.mrf.mxu0
        %v1977 = vadd.f32 0.0, %v1976
        %1978 = vmatprep.mubr.f32.mxu0 0.0
        %1979 = vmatmul.mubr.f32.gmra.mxu0 %v1417
        %v1980 = vpop.f32.mrf.mxu0
        %v1981 = vadd.f32 0.0, %v1980
        %v1982 = vpop.f32.mrf.mxu0
        %v1983 = vadd.f32 0.0, %v1982
        %1984 = vmatprep.mubr.f32.mxu0 0.0
        %1985 = vmatmul.mubr.f32.gmra.mxu0 %v1420
        %v1986 = vpop.f32.mrf.mxu0
        %v1987 = vadd.f32 0.0, %v1986
        %v1988 = vpop.f32.mrf.mxu0
        %v1989 = vadd.f32 0.0, %v1988
        %1990 = vmatprep.mubr.f32.mxu0 0.0
        %1991 = vmatmul.mubr.f32.gmra.mxu0 %v1423
        %v1992 = vpop.f32.mrf.mxu0
        %v1993 = vadd.f32 0.0, %v1992
        %v1994 = vpop.f32.mrf.mxu0
        %v1995 = vadd.f32 0.0, %v1994
        %1996 = vmatprep.mubr.f32.mxu0 0.0
        %1997 = vmatmul.mubr.f32.gmra.mxu0 %v1426
        %v1998 = vpop.f32.mrf.mxu0
        %v1999 = vadd.f32 0.0, %v1998
        %v2000 = vpop.f32.mrf.mxu0
        %v2001 = vadd.f32 0.0, %v2000
        %2002 = vmatprep.mubr.f32.mxu0 0.0
        %2003 = vmatmul.mubr.f32.gmra.mxu0 %v1429
        %v2004 = vpop.f32.mrf.mxu0
        %v2005 = vadd.f32 0.0, %v2004
        %v2006 = vpop.f32.mrf.mxu0
        %v2007 = vadd.f32 0.0, %v2006
        %2008 = vmatprep.mubr.f32.mxu0 0.0
        %2009 = vmatmul.mubr.f32.gmra.mxu0 %v1432
        %v2010 = vpop.f32.mrf.mxu0
        %v2011 = vadd.f32 0.0, %v2010
        %v2012 = vpop.f32.mrf.mxu0
        %v2013 = vadd.f32 0.0, %v2012
        %2014 = vmatprep.mubr.f32.mxu0 0.0
        %2015 = vmatmul.mubr.f32.gmra.mxu0 %v1435
        %v2016 = vpop.f32.mrf.mxu0
        %v2017 = vadd.f32 0.0, %v2016
        %v2018 = vpop.f32.mrf.mxu0
        %v2019 = vadd.f32 0.0, %v2018
        %2020 = vmatprep.mubr.f32.mxu0 0.0
        %2021 = vmatmul.mubr.f32.gmra.mxu0 %v1438
        %v2022 = vpop.f32.mrf.mxu0
        %v2023 = vadd.f32 0.0, %v2022
        %v2024 = vpop.f32.mrf.mxu0
        %v2025 = vadd.f32 0.0, %v2024
        %2026 = vmatprep.mubr.f32.mxu0 0.0
        %2027 = vmatmul.mubr.f32.gmra.mxu0 %v1441
        %v2028 = vpop.f32.mrf.mxu0
        %v2029 = vadd.f32 0.0, %v2028
        %v2030 = vpop.f32.mrf.mxu0
        %v2031 = vadd.f32 0.0, %v2030
        %2032 = vmatprep.mubr.f32.mxu0 0.0
        %2033 = vmatmul.mubr.f32.gmra.mxu0 %v1444
        %v2034 = vpop.f32.mrf.mxu0
        %v2035 = vadd.f32 0.0, %v2034
        %v2036 = vpop.f32.mrf.mxu0
        %v2037 = vadd.f32 0.0, %v2036
        %2038 = vmatprep.mubr.f32.mxu0 0.0
        %2039 = vmatmul.mubr.f32.gmra.mxu0 %v1447
        %v2040 = vpop.f32.mrf.mxu0
        %v2041 = vadd.f32 0.0, %v2040
        %v2042 = vpop.f32.mrf.mxu0
        %v2043 = vadd.f32 0.0, %v2042
        %2044 = vmatprep.mubr.f32.mxu0 0.0
        %2045 = vmatmul.mubr.f32.gmra.mxu0 %v1450
        %v2046 = vpop.f32.mrf.mxu0
        %v2047 = vadd.f32 0.0, %v2046
        %v2048 = vpop.f32.mrf.mxu0
        %v2049 = vadd.f32 0.0, %v2048
        %2050 = vmatprep.mubr.f32.mxu0 0.0
        %2051 = vmatmul.mubr.f32.gmra.mxu0 %v1453
        %v2052 = vpop.f32.mrf.mxu0
        %v2053 = vadd.f32 0.0, %v2052
        %v2054 = vpop.f32.mrf.mxu0
        %v2055 = vadd.f32 0.0, %v2054
        %2056 = vmatprep.mubr.f32.mxu0 0.0
        %2057 = vmatmul.mubr.f32.gmra.mxu0 %v1456
        %v2058 = vpop.f32.mrf.mxu0
        %v2059 = vadd.f32 0.0, %v2058
        %v2060 = vpop.f32.mrf.mxu0
        %v2061 = vadd.f32 0.0, %v2060
        %2062 = vmatprep.mubr.f32.mxu0 0.0
        %2063 = vmatmul.mubr.f32.gmra.mxu0 %v1459
        %v2064 = vpop.f32.mrf.mxu0
        %v2065 = vadd.f32 0.0, %v2064
        %v2066 = vpop.f32.mrf.mxu0
        %v2067 = vadd.f32 0.0, %v2066
        %2068 = vmatprep.mubr.f32.mxu0 0.0
        %2069 = vmatmul.mubr.f32.gmra.mxu0 %v1462
        %v2070 = vpop.f32.mrf.mxu0
        %v2071 = vadd.f32 0.0, %v2070
        %v2072 = vpop.f32.mrf.mxu0
        %v2073 = vadd.f32 0.0, %v2072
        %2074 = vmatprep.mubr.f32.mxu0 0.0
        %2075 = vmatmul.mubr.f32.gmra.mxu0 %v1465
        %v2076 = vpop.f32.mrf.mxu0
        %v2077 = vadd.f32 0.0, %v2076
        %v2078 = vpop.f32.mrf.mxu0
        %v2079 = vadd.f32 0.0, %v2078
        %2080 = vmatprep.mubr.f32.mxu0 0.0
        %2081 = vmatmul.mubr.f32.gmra.mxu0 %v1468
        %v2082 = vpop.f32.mrf.mxu0
        %v2083 = vadd.f32 0.0, %v2082
        %v2084 = vpop.f32.mrf.mxu0
        %v2085 = vadd.f32 0.0, %v2084
        %2086 = vmatprep.mubr.f32.mxu0 0.0
        %2087 = vmatmul.mubr.f32.gmra.mxu0 %v1471
        %v2088 = vpop.f32.mrf.mxu0
        %v2089 = vadd.f32 0.0, %v2088
        %v2090 = vpop.f32.mrf.mxu0
        %v2091 = vadd.f32 0.0, %v2090
        %2092 = vmatprep.mubr.f32.mxu0 0.0
        %2093 = vmatmul.mubr.f32.gmra.mxu0 %v1474
        %v2094 = vpop.f32.mrf.mxu0
        %v2095 = vadd.f32 0.0, %v2094
        %v2096 = vpop.f32.mrf.mxu0
        %v2097 = vadd.f32 0.0, %v2096
        %2098 = vmatprep.mubr.f32.mxu0 0.0
        %2099 = vmatmul.mubr.f32.gmra.mxu0 %v1477
        %v2100 = vpop.f32.mrf.mxu0
        %v2101 = vadd.f32 0.0, %v2100
        %v2102 = vpop.f32.mrf.mxu0
        %v2103 = vadd.f32 0.0, %v2102
        %2104 = vmatprep.mubr.f32.mxu0 0.0
        %2105 = vmatmul.mubr.f32.gmra.mxu0 %v1480
        %v2106 = vpop.f32.mrf.mxu0
        %v2107 = vadd.f32 0.0, %v2106
        %v2108 = vpop.f32.mrf.mxu0
        %v2109 = vadd.f32 0.0, %v2108
        %2110 = vmatprep.mubr.f32.mxu0 0.0
        %2111 = vmatmul.mubr.f32.gmra.mxu0 %v1483
        %v2112 = vpop.f32.mrf.mxu0
        %v2113 = vadd.f32 0.0, %v2112
        %v2114 = vpop.f32.mrf.mxu0
        %v2115 = vadd.f32 0.0, %v2114
        %2116 = vmatprep.mubr.f32.mxu0 0.0
        %2117 = vmatmul.mubr.f32.gmra.mxu0 %v1486
        %v2118 = vpop.f32.mrf.mxu0
        %v2119 = vadd.f32 0.0, %v2118
        %v2120 = vpop.f32.mrf.mxu0
        %v2121 = vadd.f32 0.0, %v2120
        %2122 = vmatprep.mubr.f32.mxu0 0.0
        %2123 = vmatmul.mubr.f32.gmra.mxu0 %v1489
        %v2124 = vpop.f32.mrf.mxu0
        %v2125 = vadd.f32 0.0, %v2124
        %v2126 = vpop.f32.mrf.mxu0
        %v2127 = vadd.f32 0.0, %v2126
        %2128 = vmatprep.mubr.f32.mxu0 0.0
        %2129 = vmatmul.mubr.f32.gmra.mxu0 %v1492
        %v2130 = vpop.f32.mrf.mxu0
        %v2131 = vadd.f32 0.0, %v2130
        %v2132 = vpop.f32.mrf.mxu0
        %v2133 = vadd.f32 0.0, %v2132
        %2134 = vmatprep.mubr.f32.mxu0 0.0
        %2135 = vmatmul.mubr.f32.gmra.mxu0 %v1495
        %v2136 = vpop.f32.mrf.mxu0
        %v2137 = vadd.f32 0.0, %v2136
        %v2138 = vpop.f32.mrf.mxu0
        %v2139 = vadd.f32 0.0, %v2138
        %2140 = vmatprep.mubr.f32.mxu0 0.0
        %2141 = vmatmul.mubr.f32.gmra.mxu0 %v1498
        %v2142 = vpop.f32.mrf.mxu0
        %v2143 = vadd.f32 0.0, %v2142
        %v2144 = vpop.f32.mrf.mxu0
        %v2145 = vadd.f32 0.0, %v2144
        %2146 = vmatprep.mubr.f32.mxu0 0.0
        %2147 = vmatmul.mubr.f32.gmra.mxu0 %v1501
        %v2148 = vpop.f32.mrf.mxu0
        %v2149 = vadd.f32 0.0, %v2148
        %v2150 = vpop.f32.mrf.mxu0
        %v2151 = vadd.f32 0.0, %v2150
        %2152 = vmatprep.mubr.f32.mxu0 0.0
        %2153 = vmatmul.mubr.f32.gmra.mxu0 %v1504
        %v2154 = vpop.f32.mrf.mxu0
        %v2155 = vadd.f32 0.0, %v2154
        %v2156 = vpop.f32.mrf.mxu0
        %v2157 = vadd.f32 0.0, %v2156
        %2158 = vmatprep.mubr.f32.mxu0 0.0
        %2159 = vmatmul.mubr.f32.gmra.mxu0 %v1507
        %v2160 = vpop.f32.mrf.mxu0
        %v2161 = vadd.f32 0.0, %v2160
        %v2162 = vpop.f32.mrf.mxu0
        %v2163 = vadd.f32 0.0, %v2162
        %2164 = vmatprep.mubr.f32.mxu0 0.0
        %2165 = vmatmul.mubr.f32.gmra.mxu0 %v1510
        %v2166 = vpop.f32.mrf.mxu0
        %v2167 = vadd.f32 0.0, %v2166
        %v2168 = vpop.f32.mrf.mxu0
        %v2169 = vadd.f32 0.0, %v2168
        %2170 = vmatprep.mubr.f32.mxu0 0.0
        %2171 = vmatmul.mubr.f32.gmra.mxu0 %v1513
        %v2172 = vpop.f32.mrf.mxu0
        %v2173 = vadd.f32 0.0, %v2172
        %v2174 = vpop.f32.mrf.mxu0
        %v2175 = vadd.f32 0.0, %v2174
        %2176 = vmatprep.mubr.f32.mxu0 0.0
        %2177 = vmatmul.mubr.f32.gmra.mxu0 %v1516
        %v2178 = vpop.f32.mrf.mxu0
        %v2179 = vadd.f32 0.0, %v2178
        %v2180 = vpop.f32.mrf.mxu0
        %v2181 = vadd.f32 0.0, %v2180
        %2182 = vmatprep.mubr.f32.mxu0 0.0
        %2183 = vmatmul.mubr.f32.gmra.mxu0 %v1519
        %v2184 = vpop.f32.mrf.mxu0
        %v2185 = vadd.f32 0.0, %v2184
        %v2186 = vpop.f32.mrf.mxu0
        %v2187 = vadd.f32 0.0, %v2186
        %2188 = vmatprep.mubr.f32.mxu0 0.0
        %2189 = vmatmul.mubr.f32.gmra.mxu0 %v1522
        %v2190 = vpop.f32.mrf.mxu0
        %v2191 = vadd.f32 0.0, %v2190
        %v2192 = vpop.f32.mrf.mxu0
        %v2193 = vadd.f32 0.0, %v2192
        %2194 = vmatprep.mubr.f32.mxu0 0.0
        %2195 = vmatmul.mubr.f32.gmra.mxu0 %v1525
        %v2196 = vpop.f32.mrf.mxu0
        %v2197 = vadd.f32 0.0, %v2196
        %v2198 = vpop.f32.mrf.mxu0
        %v2199 = vadd.f32 0.0, %v2198
        %2200 = vmatprep.mubr.f32.mxu0 0.0
        %2201 = vmatmul.mubr.f32.gmra.mxu0 %v1528
        %v2202 = vpop.f32.mrf.mxu0
        %v2203 = vadd.f32 0.0, %v2202
        %v2204 = vpop.f32.mrf.mxu0
        %v2205 = vadd.f32 0.0, %v2204
        %2206 = vmatprep.mubr.f32.mxu0 0.0
        %2207 = vmatmul.mubr.f32.gmra.mxu0 %v1531
        %v2208 = vpop.f32.mrf.mxu0
        %v2209 = vadd.f32 0.0, %v2208
        %v2210 = vpop.f32.mrf.mxu0
        %v2211 = vadd.f32 0.0, %v2210
        %2212 = vmatprep.mubr.f32.mxu0 0.0
        %2213 = vmatmul.mubr.f32.gmra.mxu0 %v1534
        %v2214 = vpop.f32.mrf.mxu0
        %v2215 = vadd.f32 0.0, %v2214
        %v2216 = vpop.f32.mrf.mxu0
        %v2217 = vadd.f32 0.0, %v2216
        %2218 = vmatprep.mubr.f32.mxu0 0.0
        %2219 = vmatmul.mubr.f32.gmra.mxu0 %v1537
        %v2220 = vpop.f32.mrf.mxu0
        %v2221 = vadd.f32 0.0, %v2220
        %v2222 = vpop.f32.mrf.mxu0
        %v2223 = vadd.f32 0.0, %v2222
        %2224 = vmatprep.mubr.f32.mxu0 0.0
        %2225 = vmatmul.mubr.f32.gmra.mxu0 %v1540
        %v2226 = vpop.f32.mrf.mxu0
        %v2227 = vadd.f32 0.0, %v2226
        %v2228 = vpop.f32.mrf.mxu0
        %v2229 = vadd.f32 0.0, %v2228
        %2230 = vmatprep.mubr.f32.mxu0 0.0
        %2231 = vmatmul.mubr.f32.gmra.mxu0 %v1543
        %v2232 = vpop.f32.mrf.mxu0
        %v2233 = vadd.f32 0.0, %v2232
        %v2234 = vpop.f32.mrf.mxu0
        %v2235 = vadd.f32 0.0, %v2234
        %2236 = vmatprep.mubr.f32.mxu0 0.0
        %2237 = vmatmul.mubr.f32.gmra.mxu0 %v1546
        %v2238 = vpop.f32.mrf.mxu0
        %v2239 = vadd.f32 0.0, %v2238
        %v2240 = vpop.f32.mrf.mxu0
        %v2241 = vadd.f32 0.0, %v2240
        %2242 = vmatprep.mubr.f32.mxu0 0.0
        %2243 = vmatmul.mubr.f32.gmra.mxu0 %v1549
        %v2244 = vpop.f32.mrf.mxu0
        %v2245 = vadd.f32 0.0, %v2244
        %v2246 = vpop.f32.mrf.mxu0
        %v2247 = vadd.f32 0.0, %v2246
        %2248 = vmatprep.mubr.f32.mxu0 0.0
        %2249 = vmatmul.mubr.f32.gmra.mxu0 %v1552
        %v2250 = vpop.f32.mrf.mxu0
        %v2251 = vadd.f32 0.0, %v2250
        %v2252 = vpop.f32.mrf.mxu0
        %v2253 = vadd.f32 0.0, %v2252
        %2254 = vmatprep.mubr.f32.mxu0 0.0
        %2255 = vmatmul.mubr.f32.gmra.mxu0 %v1555
        %v2256 = vpop.f32.mrf.mxu0
        %v2257 = vadd.f32 0.0, %v2256
        %v2258 = vpop.f32.mrf.mxu0
        %v2259 = vadd.f32 0.0, %v2258
        %2260 = vmatprep.mubr.f32.mxu0 0.0
        %2261 = vmatmul.mubr.f32.gmra.mxu0 %v1558
        %v2262 = vpop.f32.mrf.mxu0
        %v2263 = vadd.f32 0.0, %v2262
        %v2264 = vpop.f32.mrf.mxu0
        %v2265 = vadd.f32 0.0, %v2264
        %2266 = vmatprep.mubr.f32.mxu0 0.0
        %2267 = vmatmul.mubr.f32.gmra.mxu0 %v1561
        %v2268 = vpop.f32.mrf.mxu0
        %v2269 = vadd.f32 0.0, %v2268
        %v2270 = vpop.f32.mrf.mxu0
        %v2271 = vadd.f32 0.0, %v2270
        %2272 = vmatprep.mubr.f32.mxu0 0.0
        %2273 = vmatmul.mubr.f32.gmra.mxu0 %v1564
        %v2274 = vpop.f32.mrf.mxu0
        %v2275 = vadd.f32 0.0, %v2274
        %v2276 = vpop.f32.mrf.mxu0
        %v2277 = vadd.f32 0.0, %v2276
        %2278 = vmatprep.mubr.f32.mxu0 0.0
        %2279 = vmatmul.mubr.f32.gmra.mxu0 %v1567
        %v2280 = vpop.f32.mrf.mxu0
        %v2281 = vadd.f32 0.0, %v2280
        %v2282 = vpop.f32.mrf.mxu0
        %v2283 = vadd.f32 0.0, %v2282
        %2284 = vmatprep.mubr.f32.mxu0 0.0
        %2285 = vmatmul.mubr.f32.gmra.mxu0 %v1570
        %v2286 = vpop.f32.mrf.mxu0
        %v2287 = vadd.f32 0.0, %v2286
        %v2288 = vpop.f32.mrf.mxu0
        %v2289 = vadd.f32 0.0, %v2288
        %2290 = vmatprep.mubr.f32.mxu0 0.0
        %2291 = vmatmul.mubr.f32.gmra.mxu0 %v1573
        %v2292 = vpop.f32.mrf.mxu0
        %v2293 = vadd.f32 0.0, %v2292
        %v2294 = vpop.f32.mrf.mxu0
        %v2295 = vadd.f32 0.0, %v2294
        %2296 = vmatprep.mubr.f32.mxu0 0.0
        %2297 = vmatmul.mubr.f32.gmra.mxu0 %v1576
        %v2298 = vpop.f32.mrf.mxu0
        %v2299 = vadd.f32 0.0, %v2298
        %v2300 = vpop.f32.mrf.mxu0
        %v2301 = vadd.f32 0.0, %v2300
        %2302 = vmatprep.mubr.f32.mxu0 0.0
        %2303 = vmatmul.mubr.f32.gmra.mxu0 %v1579
        %v2304 = vpop.f32.mrf.mxu0
        %v2305 = vadd.f32 0.0, %v2304
        %v2306 = vpop.f32.mrf.mxu0
        %v2307 = vadd.f32 0.0, %v2306
        %2308 = vmatprep.mubr.f32.mxu0 0.0
        %2309 = vmatmul.mubr.f32.gmra.mxu0 %v1582
        %v2310 = vpop.f32.mrf.mxu0
        %v2311 = vadd.f32 0.0, %v2310
        %v2312 = vpop.f32.mrf.mxu0
        %v2313 = vadd.f32 0.0, %v2312
        %2314 = vmatprep.mubr.f32.mxu0 0.0
        %2315 = vmatmul.mubr.f32.gmra.mxu0 %v1585
        %v2316 = vpop.f32.mrf.mxu0
        %v2317 = vadd.f32 0.0, %v2316
        %v2318 = vpop.f32.mrf.mxu0
        %v2319 = vadd.f32 0.0, %v2318
        %2320 = vmatprep.mubr.f32.mxu0 0.0
        %2321 = vmatmul.mubr.f32.gmra.mxu0 %v1588
        %v2322 = vpop.f32.mrf.mxu0
        %v2323 = vadd.f32 0.0, %v2322
        %v2324 = vpop.f32.mrf.mxu0
        %v2325 = vadd.f32 0.0, %v2324
        %2326 = vmatprep.mubr.f32.mxu0 0.0
        %2327 = vmatmul.mubr.f32.gmra.mxu0 %v1591
        %v2328 = vpop.f32.mrf.mxu0
        %v2329 = vadd.f32 0.0, %v2328
        %v2330 = vpop.f32.mrf.mxu0
        %v2331 = vadd.f32 0.0, %v2330
        %2332 = vmatprep.mubr.f32.mxu0 0.0
        %2333 = vmatmul.mubr.f32.gmra.mxu0 %v1594
        %v2334 = vpop.f32.mrf.mxu0
        %v2335 = vadd.f32 0.0, %v2334
        %v2336 = vpop.f32.mrf.mxu0
        %v2337 = vadd.f32 0.0, %v2336
        %2338 = vmatprep.mubr.f32.mxu0 0.0
        %2339 = vmatmul.mubr.f32.gmra.mxu0 %v1597
        %v2340 = vpop.f32.mrf.mxu0
        %v2341 = vadd.f32 0.0, %v2340
        %v2342 = vpop.f32.mrf.mxu0
        %v2343 = vadd.f32 0.0, %v2342
        %2344 = vmatprep.mubr.f32.mxu0 0.0
        %2345 = vmatmul.mubr.f32.gmra.mxu0 %v1600
        %v2346 = vpop.f32.mrf.mxu0
        %v2347 = vadd.f32 0.0, %v2346
        %v2348 = vpop.f32.mrf.mxu0
        %v2349 = vadd.f32 0.0, %v2348
        %2350 = vmatprep.mubr.f32.mxu0 0.0
        %2351 = vmatmul.mubr.f32.gmra.mxu0 %v1603
        %v2352 = vpop.f32.mrf.mxu0
        %v2353 = vadd.f32 0.0, %v2352
        %v2354 = vpop.f32.mrf.mxu0
        %v2355 = vadd.f32 0.0, %v2354
        %2356 = vmatprep.mubr.f32.mxu0 0.0
        %2357 = vmatmul.mubr.f32.gmra.mxu0 %v1606
        %v2358 = vpop.f32.mrf.mxu0
        %v2359 = vadd.f32 0.0, %v2358
        %v2360 = vpop.f32.mrf.mxu0
        %v2361 = vadd.f32 0.0, %v2360
        %2362 = vmatprep.mubr.f32.mxu0 0.0
        %2363 = vmatmul.mubr.f32.gmra.mxu0 %v1609
        %v2364 = vpop.f32.mrf.mxu0
        %v2365 = vadd.f32 0.0, %v2364
        %v2366 = vpop.f32.mrf.mxu0
        %v2367 = vadd.f32 0.0, %v2366
        %2368 = vmatprep.mubr.f32.mxu0 0.0
        %2369 = vmatmul.mubr.f32.gmra.mxu0 %v1612
        %v2370 = vpop.f32.mrf.mxu0
        %v2371 = vadd.f32 0.0, %v2370
        %v2372 = vpop.f32.mrf.mxu0
        %v2373 = vadd.f32 0.0, %v2372
        %2374 = vmatprep.mubr.f32.mxu0 0.0
        %2375 = vmatmul.mubr.f32.gmra.mxu0 %v1615
        %v2376 = vpop.f32.mrf.mxu0
        %v2377 = vadd.f32 0.0, %v2376
        %v2378 = vpop.f32.mrf.mxu0
        %v2379 = vadd.f32 0.0, %v2378
        %2380 = vmatprep.mubr.f32.mxu0 0.0
        %2381 = vmatmul.mubr.f32.gmra.mxu0 %v1618
        %v2382 = vpop.f32.mrf.mxu0
        %v2383 = vadd.f32 0.0, %v2382
        %v2384 = vpop.f32.mrf.mxu0
        %v2385 = vadd.f32 0.0, %v2384
        %2386 = vmatprep.mubr.f32.mxu0 0.0
        %2387 = vmatmul.mubr.f32.gmra.mxu0 %v1621
        %v2388 = vpop.f32.mrf.mxu0
        %v2389 = vadd.f32 0.0, %v2388
        %v2390 = vpop.f32.mrf.mxu0
        %v2391 = vadd.f32 0.0, %v2390
        %2392 = vmatprep.mubr.f32.mxu0 0.0
        %2393 = vmatmul.mubr.f32.gmra.mxu0 %v1624
        %v2394 = vpop.f32.mrf.mxu0
        %v2395 = vadd.f32 0.0, %v2394
        %v2396 = vpop.f32.mrf.mxu0
        %v2397 = vadd.f32 0.0, %v2396
        %2398 = vmatprep.mubr.f32.mxu0 0.0
        %2399 = vmatmul.mubr.f32.gmra.mxu0 %v1627
        %v2400 = vpop.f32.mrf.mxu0
        %v2401 = vadd.f32 0.0, %v2400
        %v2402 = vpop.f32.mrf.mxu0
        %v2403 = vadd.f32 0.0, %v2402
        %2404 = vmatprep.mubr.f32.mxu0 0.0
        %2405 = vmatmul.mubr.f32.gmra.mxu0 %v1630
        %v2406 = vpop.f32.mrf.mxu0
        %v2407 = vadd.f32 0.0, %v2406
        %v2408 = vpop.f32.mrf.mxu0
        %v2409 = vadd.f32 0.0, %v2408
        %2410 = vmatprep.mubr.f32.mxu0 0.0
        %2411 = vmatmul.mubr.f32.gmra.mxu0 %v1633
        %v2412 = vpop.f32.mrf.mxu0
        %v2413 = vadd.f32 0.0, %v2412
        %v2414 = vpop.f32.mrf.mxu0
        %v2415 = vadd.f32 0.0, %v2414
        %2416 = vmatprep.mubr.f32.mxu0 0.0
        %2417 = vmatmul.mubr.f32.gmra.mxu0 %v1636
        %v2418 = vpop.f32.mrf.mxu0
        %v2419 = vadd.f32 0.0, %v2418
        %v2420 = vpop.f32.mrf.mxu0
        %v2421 = vadd.f32 0.0, %v2420
        %2422 = vmatprep.mubr.f32.mxu0 0.0
        %2423 = vmatmul.mubr.f32.gmra.mxu0 %v1639
        %v2424 = vpop.f32.mrf.mxu0
        %v2425 = vadd.f32 0.0, %v2424
        %v2426 = vpop.f32.mrf.mxu0
        %v2427 = vadd.f32 0.0, %v2426
        %2428 = vmatprep.mubr.f32.mxu0 0.0
        %2429 = vmatmul.mubr.f32.gmra.mxu0 %v1642
        %v2430 = vpop.f32.mrf.mxu0
        %v2431 = vadd.f32 0.0, %v2430
        %v2432 = vpop.f32.mrf.mxu0
        %v2433 = vadd.f32 0.0, %v2432
        %2434 = vmatprep.mubr.f32.mxu0 0.0
        %2435 = vmatmul.mubr.f32.gmra.mxu0 %v1645
        %v2436 = vpop.f32.mrf.mxu0
        %v2437 = vadd.f32 0.0, %v2436
        %v2438 = vpop.f32.mrf.mxu0
        %v2439 = vadd.f32 0.0, %v2438
        %2440 = vmatprep.mubr.f32.mxu0 0.0
        %2441 = vmatmul.mubr.f32.gmra.mxu0 %v1648
        %v2442 = vpop.f32.mrf.mxu0
        %v2443 = vadd.f32 0.0, %v2442
        %v2444 = vpop.f32.mrf.mxu0
        %v2445 = vadd.f32 0.0, %v2444
        %2446 = vmatprep.mubr.f32.mxu0 0.0
        %2447 = vmatmul.mubr.f32.gmra.mxu0 %v1651
        %v2448 = vpop.f32.mrf.mxu0
        %v2449 = vadd.f32 0.0, %v2448
        %v2450 = vpop.f32.mrf.mxu0
        %v2451 = vadd.f32 0.0, %v2450
        %2452 = vmatprep.mubr.f32.mxu0 0.0
        %2453 = vmatmul.mubr.f32.gmra.mxu0 %v1654
        %v2454 = vpop.f32.mrf.mxu0
        %v2455 = vadd.f32 0.0, %v2454
        %v2456 = vpop.f32.mrf.mxu0
        %v2457 = vadd.f32 0.0, %v2456
        %2458 = vmatprep.mubr.f32.mxu0 0.0
        %2459 = vmatmul.mubr.f32.gmra.mxu0 %v1657
        %v2460 = vpop.f32.mrf.mxu0
        %v2461 = vadd.f32 0.0, %v2460
        %v2462 = vpop.f32.mrf.mxu0
        %v2463 = vadd.f32 0.0, %v2462
        %2464 = vmatprep.mubr.f32.mxu0 0.0
        %2465 = vmatmul.mubr.f32.gmra.mxu0 %v1660
        %v2466 = vpop.f32.mrf.mxu0
        %v2467 = vadd.f32 0.0, %v2466
        %v2468 = vpop.f32.mrf.mxu0
        %v2469 = vadd.f32 0.0, %v2468
        %2470 = vmatprep.mubr.f32.mxu0 0.0
        %2471 = vmatmul.mubr.f32.gmra.mxu0 %v1663
        %v2472 = vpop.f32.mrf.mxu0
        %v2473 = vadd.f32 0.0, %v2472
        %v2474 = vpop.f32.mrf.mxu0
        %v2475 = vadd.f32 0.0, %v2474
        %2476 = vmatprep.mubr.f32.mxu0 0.0
        %2477 = vmatmul.mubr.f32.gmra.mxu0 %v1666
        %v2478 = vpop.f32.mrf.mxu0
        %v2479 = vadd.f32 0.0, %v2478
        %v2480 = vpop.f32.mrf.mxu0
        %v2481 = vadd.f32 0.0, %v2480
        %2482 = vmatprep.mubr.f32.mxu0 0.0
        %2483 = vmatmul.mubr.f32.gmra.mxu0 %v1669
        %v2484 = vpop.f32.mrf.mxu0
        %v2485 = vadd.f32 0.0, %v2484
        %v2486 = vpop.f32.mrf.mxu0
        %v2487 = vadd.f32 0.0, %v2486
        %2488 = vmatprep.mubr.f32.mxu0 0.0
        %2489 = vmatmul.mubr.f32.gmra.mxu0 %v1672
        %v2490 = vpop.f32.mrf.mxu0
        %v2491 = vadd.f32 0.0, %v2490
        %v2492 = vpop.f32.mrf.mxu0
        %v2493 = vadd.f32 0.0, %v2492
        %2494 = vmatprep.mubr.f32.mxu0 0.0
        %2495 = vmatmul.mubr.f32.gmra.mxu0 %v1675
        %v2496 = vpop.f32.mrf.mxu0
        %v2497 = vadd.f32 0.0, %v2496
        %v2498 = vpop.f32.mrf.mxu0
        %v2499 = vadd.f32 0.0, %v2498
        %2500 = vmatprep.mubr.f32.mxu0 0.0
        %2501 = vmatmul.mubr.f32.gmra.mxu0 %v1678
        %v2502 = vpop.f32.mrf.mxu0
        %v2503 = vadd.f32 0.0, %v2502
        %v2504 = vpop.f32.mrf.mxu0
        %v2505 = vadd.f32 0.0, %v2504
        %2506 = vmatprep.mubr.f32.mxu0 0.0
        %2507 = vmatmul.mubr.f32.gmra.mxu0 %v1681
        %v2508 = vpop.f32.mrf.mxu0
        %v2509 = vadd.f32 0.0, %v2508
        %v2510 = vpop.f32.mrf.mxu0
        %v2511 = vadd.f32 0.0, %v2510
        %2512 = vmatprep.mubr.f32.mxu0 0.0
        %2513 = vmatmul.mubr.f32.gmra.mxu0 %v1684
        %v2514 = vpop.f32.mrf.mxu0
        %v2515 = vadd.f32 0.0, %v2514
        %v2516 = vpop.f32.mrf.mxu0
        %v2517 = vadd.f32 0.0, %v2516
        %2518 = vdwg.mxu0
        %2519 = vst [vmem:[%s271] sm:$0xff] %v1753
        %2520 = vst [vmem:[%s271 + $0x8] sm:$0xff] %v1755
        %2521 = vst [vmem:[%s271 + $0x10] sm:$0xff] %v1759
        %2522 = vst [vmem:[%s271 + $0x18] sm:$0xff] %v1761
        %2523 = vst [vmem:[%s271 + $0x20] sm:$0xff] %v1765
        %2524 = vst [vmem:[%s271 + $0x28] sm:$0xff] %v1767
        %2525 = vst [vmem:[%s271 + $0x30] sm:$0xff] %v1771
        %2526 = vst [vmem:[%s271 + $0x38] sm:$0xff] %v1773
        %2527 = vst [vmem:[%s271 + $0x40] sm:$0xff] %v1777
        %2528 = vst [vmem:[%s271 + $0x48] sm:$0xff] %v1779
        %2529 = vst [vmem:[%s271 + $0x50] sm:$0xff] %v1783
        %2530 = vst [vmem:[%s271 + $0x58] sm:$0xff] %v1785
        %2531 = vst [vmem:[%s271 + $0x60] sm:$0xff] %v1789
        %2532 = vst [vmem:[%s271 + $0x68] sm:$0xff] %v1791
        %2533 = vst [vmem:[%s271 + $0x70] sm:$0xff] %v1795
        %2534 = vst [vmem:[%s271 + $0x78] sm:$0xff] %v1797
        %2535 = vst [vmem:[%s271 + $0x80] sm:$0xff] %v1801
        %2536 = vst [vmem:[%s271 + $0x88] sm:$0xff] %v1803
        %2537 = vst [vmem:[%s271 + $0x90] sm:$0xff] %v1807
        %2538 = vst [vmem:[%s271 + $0x98] sm:$0xff] %v1809
        %2539 = vst [vmem:[%s271 + $0xa0] sm:$0xff] %v1813
        %2540 = vst [vmem:[%s271 + $0xa8] sm:$0xff] %v1815
        %2541 = vst [vmem:[%s271 + $0xb0] sm:$0xff] %v1819
        %2542 = vst [vmem:[%s271 + $0xb8] sm:$0xff] %v1821
        %2543 = vst [vmem:[%s271 + $0xc0] sm:$0xff] %v1825
        %2544 = vst [vmem:[%s271 + $0xc8] sm:$0xff] %v1827
        %2545 = vst [vmem:[%s271 + $0xd0] sm:$0xff] %v1831
        %2546 = vst [vmem:[%s271 + $0xd8] sm:$0xff] %v1833
        %2547 = vst [vmem:[%s271 + $0xe0] sm:$0xff] %v1837
        %2548 = vst [vmem:[%s271 + $0xe8] sm:$0xff] %v1839
        %2549 = vst [vmem:[%s271 + $0xf0] sm:$0xff] %v1843
        %2550 = vst [vmem:[%s271 + $0xf8] sm:$0xff] %v1845
        %2551 = vst [vmem:[%s271 + $0x100] sm:$0xff] %v1849
        %2552 = vst [vmem:[%s271 + $0x108] sm:$0xff] %v1851
        %2553 = vst [vmem:[%s271 + $0x110] sm:$0xff] %v1855
        %2554 = vst [vmem:[%s271 + $0x118] sm:$0xff] %v1857
        %2555 = vst [vmem:[%s271 + $0x120] sm:$0xff] %v1861
        %2556 = vst [vmem:[%s271 + $0x128] sm:$0xff] %v1863
        %2557 = vst [vmem:[%s271 + $0x130] sm:$0xff] %v1867
        %2558 = vst [vmem:[%s271 + $0x138] sm:$0xff] %v1869
        %2559 = vst [vmem:[%s271 + $0x140] sm:$0xff] %v1873
        %2560 = vst [vmem:[%s271 + $0x148] sm:$0xff] %v1875
        %2561 = vst [vmem:[%s271 + $0x150] sm:$0xff] %v1879
        %2562 = vst [vmem:[%s271 + $0x158] sm:$0xff] %v1881
        %2563 = vst [vmem:[%s271 + $0x160] sm:$0xff] %v1885
        %2564 = vst [vmem:[%s271 + $0x168] sm:$0xff] %v1887
        %2565 = vst [vmem:[%s271 + $0x170] sm:$0xff] %v1891
        %2566 = vst [vmem:[%s271 + $0x178] sm:$0xff] %v1893
        %2567 = vst [vmem:[%s271 + $0x180] sm:$0xff] %v1897
        %2568 = vst [vmem:[%s271 + $0x188] sm:$0xff] %v1899
        %2569 = vst [vmem:[%s271 + $0x190] sm:$0xff] %v1903
        %2570 = vst [vmem:[%s271 + $0x198] sm:$0xff] %v1905
        %2571 = vst [vmem:[%s271 + $0x1a0] sm:$0xff] %v1909
        %2572 = vst [vmem:[%s271 + $0x1a8] sm:$0xff] %v1911
        %2573 = vst [vmem:[%s271 + $0x1b0] sm:$0xff] %v1915
        %2574 = vst [vmem:[%s271 + $0x1b8] sm:$0xff] %v1917
        %2575 = vst [vmem:[%s271 + $0x1c0] sm:$0xff] %v1921
        %2576 = vst [vmem:[%s271 + $0x1c8] sm:$0xff] %v1923
        %2577 = vst [vmem:[%s271 + $0x1d0] sm:$0xff] %v1927
        %2578 = vst [vmem:[%s271 + $0x1d8] sm:$0xff] %v1929
        %2579 = vst [vmem:[%s271 + $0x1e0] sm:$0xff] %v1933
        %2580 = vst [vmem:[%s271 + $0x1e8] sm:$0xff] %v1935
        %2581 = vst [vmem:[%s271 + $0x1f0] sm:$0xff] %v1939
        %2582 = vst [vmem:[%s271 + $0x1f8] sm:$0xff] %v1941
        %2583 = vst [vmem:[%s271 + $0x200] sm:$0xff] %v1945
        %2584 = vst [vmem:[%s271 + $0x208] sm:$0xff] %v1947
        %2585 = vst [vmem:[%s271 + $0x210] sm:$0xff] %v1951
        %2586 = vst [vmem:[%s271 + $0x218] sm:$0xff] %v1953
        %2587 = vst [vmem:[%s271 + $0x220] sm:$0xff] %v1957
        %2588 = vst [vmem:[%s271 + $0x228] sm:$0xff] %v1959
        %2589 = vst [vmem:[%s271 + $0x230] sm:$0xff] %v1963
        %2590 = vst [vmem:[%s271 + $0x238] sm:$0xff] %v1965
        %2591 = vst [vmem:[%s271 + $0x240] sm:$0xff] %v1969
        %2592 = vst [vmem:[%s271 + $0x248] sm:$0xff] %v1971
        %2593 = vst [vmem:[%s271 + $0x250] sm:$0xff] %v1975
        %2594 = vst [vmem:[%s271 + $0x258] sm:$0xff] %v1977
        %2595 = vst [vmem:[%s271 + $0x260] sm:$0xff] %v1981
        %2596 = vst [vmem:[%s271 + $0x268] sm:$0xff] %v1983
        %2597 = vst [vmem:[%s271 + $0x270] sm:$0xff] %v1987
        %2598 = vst [vmem:[%s271 + $0x278] sm:$0xff] %v1989
        %2599 = vst [vmem:[%s271 + $0x280] sm:$0xff] %v1993
        %2600 = vst [vmem:[%s271 + $0x288] sm:$0xff] %v1995
        %2601 = vst [vmem:[%s271 + $0x290] sm:$0xff] %v1999
        %2602 = vst [vmem:[%s271 + $0x298] sm:$0xff] %v2001
        %2603 = vst [vmem:[%s271 + $0x2a0] sm:$0xff] %v2005
        %2604 = vst [vmem:[%s271 + $0x2a8] sm:$0xff] %v2007
        %2605 = vst [vmem:[%s271 + $0x2b0] sm:$0xff] %v2011
        %2606 = vst [vmem:[%s271 + $0x2b8] sm:$0xff] %v2013
        %2607 = vst [vmem:[%s271 + $0x2c0] sm:$0xff] %v2017
        %2608 = vst [vmem:[%s271 + $0x2c8] sm:$0xff] %v2019
        %2609 = vst [vmem:[%s271 + $0x2d0] sm:$0xff] %v2023
        %2610 = vst [vmem:[%s271 + $0x2d8] sm:$0xff] %v2025
        %2611 = vst [vmem:[%s271 + $0x2e0] sm:$0xff] %v2029
        %2612 = vst [vmem:[%s271 + $0x2e8] sm:$0xff] %v2031
        %2613 = vst [vmem:[%s271 + $0x2f0] sm:$0xff] %v2035
        %2614 = vst [vmem:[%s271 + $0x2f8] sm:$0xff] %v2037
        %2615 = vst [vmem:[%s271 + $0x300] sm:$0xff] %v2041
        %2616 = vst [vmem:[%s271 + $0x308] sm:$0xff] %v2043
        %2617 = vst [vmem:[%s271 + $0x310] sm:$0xff] %v2047
        %2618 = vst [vmem:[%s271 + $0x318] sm:$0xff] %v2049
        %2619 = vst [vmem:[%s271 + $0x320] sm:$0xff] %v2053
        %2620 = vst [vmem:[%s271 + $0x328] sm:$0xff] %v2055
        %2621 = vst [vmem:[%s271 + $0x330] sm:$0xff] %v2059
        %2622 = vst [vmem:[%s271 + $0x338] sm:$0xff] %v2061
        %2623 = vst [vmem:[%s271 + $0x340] sm:$0xff] %v2065
        %2624 = vst [vmem:[%s271 + $0x348] sm:$0xff] %v2067
        %2625 = vst [vmem:[%s271 + $0x350] sm:$0xff] %v2071
        %2626 = vst [vmem:[%s271 + $0x358] sm:$0xff] %v2073
        %2627 = vst [vmem:[%s271 + $0x360] sm:$0xff] %v2077
        %2628 = vst [vmem:[%s271 + $0x368] sm:$0xff] %v2079
        %2629 = vst [vmem:[%s271 + $0x370] sm:$0xff] %v2083
        %2630 = vst [vmem:[%s271 + $0x378] sm:$0xff] %v2085
        %2631 = vst [vmem:[%s271 + $0x380] sm:$0xff] %v2089
        %2632 = vst [vmem:[%s271 + $0x388] sm:$0xff] %v2091
        %2633 = vst [vmem:[%s271 + $0x390] sm:$0xff] %v2095
        %2634 = vst [vmem:[%s271 + $0x398] sm:$0xff] %v2097
        %2635 = vst [vmem:[%s271 + $0x3a0] sm:$0xff] %v2101
        %2636 = vst [vmem:[%s271 + $0x3a8] sm:$0xff] %v2103
        %2637 = vst [vmem:[%s271 + $0x3b0] sm:$0xff] %v2107
        %2638 = vst [vmem:[%s271 + $0x3b8] sm:$0xff] %v2109
        %2639 = vst [vmem:[%s271 + $0x3c0] sm:$0xff] %v2113
        %2640 = vst [vmem:[%s271 + $0x3c8] sm:$0xff] %v2115
        %2641 = vst [vmem:[%s271 + $0x3d0] sm:$0xff] %v2119
        %2642 = vst [vmem:[%s271 + $0x3d8] sm:$0xff] %v2121
        %2643 = vst [vmem:[%s271 + $0x3e0] sm:$0xff] %v2125
        %2644 = vst [vmem:[%s271 + $0x3e8] sm:$0xff] %v2127
        %2645 = vst [vmem:[%s271 + $0x3f0] sm:$0xff] %v2131
        %2646 = vst [vmem:[%s271 + $0x3f8] sm:$0xff] %v2133
        %2647 = vst [vmem:[%s271 + $0x400] sm:$0xff] %v2137
        %2648 = vst [vmem:[%s271 + $0x408] sm:$0xff] %v2139
        %2649 = vst [vmem:[%s271 + $0x410] sm:$0xff] %v2143
        %2650 = vst [vmem:[%s271 + $0x418] sm:$0xff] %v2145
        %2651 = vst [vmem:[%s271 + $0x420] sm:$0xff] %v2149
        %2652 = vst [vmem:[%s271 + $0x428] sm:$0xff] %v2151
        %2653 = vst [vmem:[%s271 + $0x430] sm:$0xff] %v2155
        %2654 = vst [vmem:[%s271 + $0x438] sm:$0xff] %v2157
        %2655 = vst [vmem:[%s271 + $0x440] sm:$0xff] %v2161
        %2656 = vst [vmem:[%s271 + $0x448] sm:$0xff] %v2163
        %2657 = vst [vmem:[%s271 + $0x450] sm:$0xff] %v2167
        %2658 = vst [vmem:[%s271 + $0x458] sm:$0xff] %v2169
        %2659 = vst [vmem:[%s271 + $0x460] sm:$0xff] %v2173
        %2660 = vst [vmem:[%s271 + $0x468] sm:$0xff] %v2175
        %2661 = vst [vmem:[%s271 + $0x470] sm:$0xff] %v2179
        %2662 = vst [vmem:[%s271 + $0x478] sm:$0xff] %v2181
        %2663 = vst [vmem:[%s271 + $0x480] sm:$0xff] %v2185
        %2664 = vst [vmem:[%s271 + $0x488] sm:$0xff] %v2187
        %2665 = vst [vmem:[%s271 + $0x490] sm:$0xff] %v2191
        %2666 = vst [vmem:[%s271 + $0x498] sm:$0xff] %v2193
        %2667 = vst [vmem:[%s271 + $0x4a0] sm:$0xff] %v2197
        %2668 = vst [vmem:[%s271 + $0x4a8] sm:$0xff] %v2199
        %2669 = vst [vmem:[%s271 + $0x4b0] sm:$0xff] %v2203
        %2670 = vst [vmem:[%s271 + $0x4b8] sm:$0xff] %v2205
        %2671 = vst [vmem:[%s271 + $0x4c0] sm:$0xff] %v2209
        %2672 = vst [vmem:[%s271 + $0x4c8] sm:$0xff] %v2211
        %2673 = vst [vmem:[%s271 + $0x4d0] sm:$0xff] %v2215
        %2674 = vst [vmem:[%s271 + $0x4d8] sm:$0xff] %v2217
        %2675 = vst [vmem:[%s271 + $0x4e0] sm:$0xff] %v2221
        %2676 = vst [vmem:[%s271 + $0x4e8] sm:$0xff] %v2223
        %2677 = vst [vmem:[%s271 + $0x4f0] sm:$0xff] %v2227
        %2678 = vst [vmem:[%s271 + $0x4f8] sm:$0xff] %v2229
        %2679 = vst [vmem:[%s271 + $0x500] sm:$0xff] %v2233
        %2680 = vst [vmem:[%s271 + $0x508] sm:$0xff] %v2235
        %2681 = vst [vmem:[%s271 + $0x510] sm:$0xff] %v2239
        %2682 = vst [vmem:[%s271 + $0x518] sm:$0xff] %v2241
        %2683 = vst [vmem:[%s271 + $0x520] sm:$0xff] %v2245
        %2684 = vst [vmem:[%s271 + $0x528] sm:$0xff] %v2247
        %2685 = vst [vmem:[%s271 + $0x530] sm:$0xff] %v2251
        %2686 = vst [vmem:[%s271 + $0x538] sm:$0xff] %v2253
        %2687 = vst [vmem:[%s271 + $0x540] sm:$0xff] %v2257
        %2688 = vst [vmem:[%s271 + $0x548] sm:$0xff] %v2259
        %2689 = vst [vmem:[%s271 + $0x550] sm:$0xff] %v2263
        %2690 = vst [vmem:[%s271 + $0x558] sm:$0xff] %v2265
        %2691 = vst [vmem:[%s271 + $0x560] sm:$0xff] %v2269
        %2692 = vst [vmem:[%s271 + $0x568] sm:$0xff] %v2271
        %2693 = vst [vmem:[%s271 + $0x570] sm:$0xff] %v2275
        %2694 = vst [vmem:[%s271 + $0x578] sm:$0xff] %v2277
        %2695 = vst [vmem:[%s271 + $0x580] sm:$0xff] %v2281
        %2696 = vst [vmem:[%s271 + $0x588] sm:$0xff] %v2283
        %2697 = vst [vmem:[%s271 + $0x590] sm:$0xff] %v2287
        %2698 = vst [vmem:[%s271 + $0x598] sm:$0xff] %v2289
        %2699 = vst [vmem:[%s271 + $0x5a0] sm:$0xff] %v2293
        %2700 = vst [vmem:[%s271 + $0x5a8] sm:$0xff] %v2295
        %2701 = vst [vmem:[%s271 + $0x5b0] sm:$0xff] %v2299
        %2702 = vst [vmem:[%s271 + $0x5b8] sm:$0xff] %v2301
        %2703 = vst [vmem:[%s271 + $0x5c0] sm:$0xff] %v2305
        %2704 = vst [vmem:[%s271 + $0x5c8] sm:$0xff] %v2307
        %2705 = vst [vmem:[%s271 + $0x5d0] sm:$0xff] %v2311
        %2706 = vst [vmem:[%s271 + $0x5d8] sm:$0xff] %v2313
        %2707 = vst [vmem:[%s271 + $0x5e0] sm:$0xff] %v2317
        %2708 = vst [vmem:[%s271 + $0x5e8] sm:$0xff] %v2319
        %2709 = vst [vmem:[%s271 + $0x5f0] sm:$0xff] %v2323
        %2710 = vst [vmem:[%s271 + $0x5f8] sm:$0xff] %v2325
        %2711 = vst [vmem:[%s271 + $0x600] sm:$0xff] %v2329
        %2712 = vst [vmem:[%s271 + $0x608] sm:$0xff] %v2331
        %2713 = vst [vmem:[%s271 + $0x610] sm:$0xff] %v2335
        %2714 = vst [vmem:[%s271 + $0x618] sm:$0xff] %v2337
        %2715 = vst [vmem:[%s271 + $0x620] sm:$0xff] %v2341
        %2716 = vst [vmem:[%s271 + $0x628] sm:$0xff] %v2343
        %2717 = vst [vmem:[%s271 + $0x630] sm:$0xff] %v2347
        %2718 = vst [vmem:[%s271 + $0x638] sm:$0xff] %v2349
        %2719 = vst [vmem:[%s271 + $0x640] sm:$0xff] %v2353
        %2720 = vst [vmem:[%s271 + $0x648] sm:$0xff] %v2355
        %2721 = vst [vmem:[%s271 + $0x650] sm:$0xff] %v2359
        %2722 = vst [vmem:[%s271 + $0x658] sm:$0xff] %v2361
        %2723 = vst [vmem:[%s271 + $0x660] sm:$0xff] %v2365
        %2724 = vst [vmem:[%s271 + $0x668] sm:$0xff] %v2367
        %2725 = vst [vmem:[%s271 + $0x670] sm:$0xff] %v2371
        %2726 = vst [vmem:[%s271 + $0x678] sm:$0xff] %v2373
        %2727 = vst [vmem:[%s271 + $0x680] sm:$0xff] %v2377
        %2728 = vst [vmem:[%s271 + $0x688] sm:$0xff] %v2379
        %2729 = vst [vmem:[%s271 + $0x690] sm:$0xff] %v2383
        %2730 = vst [vmem:[%s271 + $0x698] sm:$0xff] %v2385
        %2731 = vst [vmem:[%s271 + $0x6a0] sm:$0xff] %v2389
        %2732 = vst [vmem:[%s271 + $0x6a8] sm:$0xff] %v2391
        %2733 = vst [vmem:[%s271 + $0x6b0] sm:$0xff] %v2395
        %2734 = vst [vmem:[%s271 + $0x6b8] sm:$0xff] %v2397
        %2735 = vst [vmem:[%s271 + $0x6c0] sm:$0xff] %v2401
        %2736 = vst [vmem:[%s271 + $0x6c8] sm:$0xff] %v2403
        %2737 = vst [vmem:[%s271 + $0x6d0] sm:$0xff] %v2407
        %2738 = vst [vmem:[%s271 + $0x6d8] sm:$0xff] %v2409
        %2739 = vst [vmem:[%s271 + $0x6e0] sm:$0xff] %v2413
        %2740 = vst [vmem:[%s271 + $0x6e8] sm:$0xff] %v2415
        %2741 = vst [vmem:[%s271 + $0x6f0] sm:$0xff] %v2419
        %2742 = vst [vmem:[%s271 + $0x6f8] sm:$0xff] %v2421
        %2743 = vst [vmem:[%s271 + $0x700] sm:$0xff] %v2425
        %2744 = vst [vmem:[%s271 + $0x708] sm:$0xff] %v2427
        %2745 = vst [vmem:[%s271 + $0x710] sm:$0xff] %v2431
        %2746 = vst [vmem:[%s271 + $0x718] sm:$0xff] %v2433
        %2747 = vst [vmem:[%s271 + $0x720] sm:$0xff] %v2437
        %2748 = vst [vmem:[%s271 + $0x728] sm:$0xff] %v2439
        %2749 = vst [vmem:[%s271 + $0x730] sm:$0xff] %v2443
        %2750 = vst [vmem:[%s271 + $0x738] sm:$0xff] %v2445
        %2751 = vst [vmem:[%s271 + $0x740] sm:$0xff] %v2449
        %2752 = vst [vmem:[%s271 + $0x748] sm:$0xff] %v2451
        %2753 = vst [vmem:[%s271 + $0x750] sm:$0xff] %v2455
        %2754 = vst [vmem:[%s271 + $0x758] sm:$0xff] %v2457
        %2755 = vst [vmem:[%s271 + $0x760] sm:$0xff] %v2461
        %2756 = vst [vmem:[%s271 + $0x768] sm:$0xff] %v2463
        %2757 = vst [vmem:[%s271 + $0x770] sm:$0xff] %v2467
        %2758 = vst [vmem:[%s271 + $0x778] sm:$0xff] %v2469
        %2759 = vst [vmem:[%s271 + $0x780] sm:$0xff] %v2473
        %2760 = vst [vmem:[%s271 + $0x788] sm:$0xff] %v2475
        %2761 = vst [vmem:[%s271 + $0x790] sm:$0xff] %v2479
        %2762 = vst [vmem:[%s271 + $0x798] sm:$0xff] %v2481
        %2763 = vst [vmem:[%s271 + $0x7a0] sm:$0xff] %v2485
        %2764 = vst [vmem:[%s271 + $0x7a8] sm:$0xff] %v2487
        %2765 = vst [vmem:[%s271 + $0x7b0] sm:$0xff] %v2491
        %2766 = vst [vmem:[%s271 + $0x7b8] sm:$0xff] %v2493
        %2767 = vst [vmem:[%s271 + $0x7c0] sm:$0xff] %v2497
        %2768 = vst [vmem:[%s271 + $0x7c8] sm:$0xff] %v2499
        %2769 = vst [vmem:[%s271 + $0x7d0] sm:$0xff] %v2503
        %2770 = vst [vmem:[%s271 + $0x7d8] sm:$0xff] %v2505
        %2771 = vst [vmem:[%s271 + $0x7e0] sm:$0xff] %v2509
        %2772 = vst [vmem:[%s271 + $0x7e8] sm:$0xff] %v2511
        %2773 = vst [vmem:[%s271 + $0x7f0] sm:$0xff] %v2515
        %2774 = vst [vmem:[%s271 + $0x7f8] sm:$0xff] %v2517
        %s2775 = sand.u32 %s181, 1
        %s2776 = scalar_lea.sflag [#allocation4], %s2775
        %s2777 = sand.u32 %s181, 1
        %s2778 = smul.addr %s2777, 2048
        %s2779 = scalar_lea.vmem [#allocation3], %s2778
        // Predicated region
        $region49: #{_lambda_.1} parent=47 // pred_check
          %p2780 = pneg %p191
        $region50: #{_lambda_.1} parent=47 // pred_check_branch
          %2782 = sbr.rel (%p2780) target = $region52
        $region51: #{_lambda_.1} parent=47 // pred_region
          %s2784 = ssub.s32 32768, 32768
          %2785 = vsyncadd %s2776, %s2784
          %s2786 = smul.addr %s21, 256
          %s2787 = smul.addr %s2786, 128
          %s2788 = scalar_lea.hbm %s7, %s2787
          %s2789 = sshll.u32 %s2779, 4
          %s2790 = int_to_ptr.vmem [resolvable:$true] %s2789
          %2795 = dma.vmem_to_hbm [thread:$0]  %s2790, 32768, %s2788, %s2776, 256, 256, 16
        $region52: #{_lambda_.1} parent=47 // pred_fallthru
          _
      $region48: #{_lambda_.1} parent=5 // pred_fallthru
        _
      %p2796 = scmp.le.s32.totalorder 2, %s16
      // Predicated region
      $region53: #{_lambda_.1} parent=5 // pred_check
        %p2797 = pneg %p2796
      $region54: #{_lambda_.1} parent=5 // pred_check_branch
        %2799 = sbr.rel (%p2797) target = $region56
      $region55: #{_lambda_.1} parent=5 // pred_region
        %s2800 = ssub.s32 %s16, 2
        // Predicated region
        $region57: #{_lambda_.1} parent=55 // pred_check
          %p2801 = pneg %p197
        $region58: #{_lambda_.1} parent=55 // pred_check_branch
          %2803 = sbr.rel (%p2801) target = $region60
        $region59: #{_lambda_.1} parent=55 // pred_region
          %s2804 = sand.u32 %s182, 1
          %s2805 = scalar_lea.sflag [#allocation4], %s2804
          %s2806 = sand.u32 %s182, 1
          %s2807 = smul.addr %s2806, 2048
          %s2808 = scalar_lea.vmem [#allocation3], %s2807
          %2809 = dma.done %s2805, 32768
        $region60: #{_lambda_.1} parent=55 // pred_fallthru
          _
      $region56: #{_lambda_.1} parent=5 // pred_fallthru
        _
    $region6: #{_lambda_.1} parent=1 // loop_footer
      %s20 = sadd.s32 1, %s16
    $region7: #{_lambda_.1} parent=1 // loop_footer_branch
      %15 = sbr.rel target = $region3
    $region8: #{_lambda_.1} parent=1 // loop_exit
      _
    %2810 = vsyncpa [#allocation4], 1
    %s2811 = scalar_lea.sflag [#allocation4], 1
    %2812 = vsyncpa %s2811, 1

</llo_original>
